<compile_context>
chip_gen: v5e
topology: v5e:2x2
jax: 0.10.0
libtpu: 0.0.40
codegen_flags: <defaults>
</compile_context>

<pallas_src>
import functools

import jax
import jax.numpy as jnp
from jax import lax
from jax.experimental import pallas as pl
from jax.experimental.pallas import tpu as pltpu

IGNORE_INDEX = -100
# Finite "-inf": keeps all arithmetic NaN-free (exp underflows to exactly 0).
NEG_INF = -1.0e30
_MIB = 1024 * 1024


def _round_up(x, m):
    return (x + m - 1) // m * m


def _sublane(dtype):
    return {4: 8, 2: 16, 1: 32}.get(jnp.dtype(dtype).itemsize, 8)


def _vmem_capacity_bytes():
    try:
        return int(pltpu.get_tpu_info().vmem_capacity_bytes)
    except Exception:
        return 64 * _MIB  # conservative (v7x-sized) fallback


def _device_kind():
    try:
        return jax.devices()[0].device_kind.lower()
    except Exception:
        return ""


def _lm_head_loss_kernel(labels_ref, h_ref, wt_ref, loss_ref, state_ref,
                         *, vocab_size, mask_vocab):
    """Grid = (nv vocab tiles [outer, reduction], nr row tiles [inner]).

    labels_ref: (TN, 1)   int32
    h_ref:      (TN, D)   native dtype
    wt_ref:     (D, TV)   native dtype (pre-transposed weights; constant over inner loop)
    loss_ref:   (TN, 1)   f32 per-row loss (written on the last vocab step only)
    state_ref:  (nr, TN, 128) f32 scratch; lanes 0/1/2 hold the running
                max / sum-exp / target-logit of each resident row tile.
    """
    v = pl.program_id(0)
    r = pl.program_id(1)
    nv = pl.num_programs(0)
    tile_n = h_ref.shape[0]
    tile_v = wt_ref.shape[1]

    state = state_ref.at[r]  # (tile_n, 128) view for this row tile

    @pl.when(v == 0)
    def _init():
        lane = lax.broadcasted_iota(jnp.int32, (tile_n, 128), 1)
        # lane 0: running max (-inf); lanes 1..: running sums (0).
        state[...] = jnp.where(lane == 0, NEG_INF, 0.0)

    # Logits tile on the MXU: (TN, D) x (D, TV), f32 accumulation, no transposes.
    s = jnp.dot(h_ref[...], wt_ref[...], preferred_element_type=jnp.float32)

    if mask_vocab:
        # Only the last vocab tile contains padded columns (Vp - V < TV by construction;
        # every tile therefore keeps >= 1 real column, so the online update never sees an
        # all-masked tile).  For non-last tiles `limit >= TV` and the mask row is all
        # zeros.  A (1, TV) additive mask costs one broadcast add instead of a full-tile
        # compare + select.
        limit = vocab_size - v * tile_v
        lane_v = lax.broadcasted_iota(jnp.int32, (1, tile_v), 1)
        s = s + jnp.where(lane_v < limit, 0.0, NEG_INF)

    labels = labels_ref[...]                       # (TN, 1) int32
    local_label = labels - v * tile_v              # target's column inside this tile (if any)
    col = lax.broadcasted_iota(jnp.int32, (tile_n, tile_v), 1)   # local column ids

    prev = state[:, 0:3]                           # one packed load of lanes 0..2
    m_prev = prev[:, 0:1]
    l_prev = prev[:, 1:2]
    t_prev = prev[:, 2:3]

    # Target-logit contribution from this vocab tile (0 if the label lies elsewhere;
    # label == -100 or out-of-range labels never match -> 0).
    t_new = t_prev + jnp.sum(jnp.where(col == local_label, s, 0.0),
                             axis=-1, keepdims=True)

    # Online (flash-style) logsumexp update.
    m_new = jnp.maximum(m_prev, jnp.max(s, axis=-1, keepdims=True))
    l_new = (jnp.exp(m_prev - m_new) * l_prev
             + jnp.sum(jnp.exp(s - m_new), axis=-1, keepdims=True))

    state[:, 0:1] = m_new
    state[:, 1:2] = l_new
    state[:, 2:3] = t_new

    @pl.when(v == nv - 1)
    def _finalize():
        # Output blocks are revisited but never re-read from HBM; the final (v == nv-1)
        # sweep over the row tiles runs last in the grid order, so its stores overwrite
        # any stale intermediate writebacks of this block.
        valid = (labels != IGNORE_INDEX).astype(jnp.float32)
        loss_ref[...] = (m_new + jnp.log(l_new) - t_new) * valid


def lm_head_loss(hidden_states, labels, weights, *,
                 tile_n=None, tile_v=None, vmem_limit_bytes=None,
                 dimension_semantics=None, weights_transposed=False):
    """Fused LM-head cross-entropy (sum reduction, ignore_index=-100).

    hidden_states: (..., D); labels: (...,) int; weights: (V, D) (nn.Linear convention)
    or (D, V) if weights_transposed=True (the wrapper caches the transposed copy).
    NOTE: labels outside [0, V) other than -100 are treated as "no target"
    (loss = logsumexp) rather than raising like torch.nn.CrossEntropyLoss.
    """
    D = hidden_states.shape[-1]
    hidden_states = hidden_states.reshape(-1, D)
    labels = labels.reshape(-1)
    N = hidden_states.shape[0]

    if weights_transposed:
        w_t = weights
        D2, V = w_t.shape
    else:
        V, D2 = weights.shape
        w_t = weights.T  # one-time HBM transpose; wrappers should cache this.
    assert D == D2, "hidden size mismatch"
    assert labels.shape[0] == N, "labels / hidden_states token count mismatch"

    h_isz = jnp.dtype(hidden_states.dtype).itemsize
    w_isz = jnp.dtype(w_t.dtype).itemsize
    sub_h = _sublane(hidden_states.dtype)

    cap = _vmem_capacity_bytes()
    big_vmem = cap >= 96 * _MIB
    kind = _device_kind()
    is_v5e = ("v5 lite" in kind) or ("v5e" in kind)

    # Generation-aware defaults: bigger tiles cut the hidden-state re-stream traffic on
    # 128-MiB parts (v6e); v5e is MXU-bound so smaller tiles avoid wasted VMEM; v7x
    # (64 MiB) is handled by the fit loop below.
    if tile_n is None:
        tile_n = 256 if (is_v5e or not big_vmem) else 512
    if tile_v is None:
        tile_v = 1024 if (is_v5e or not big_vmem) else 2048

    tile_n = _round_up(max(min(tile_n, N), sub_h), sub_h)
    tile_v = _round_up(max(min(tile_v, V), 128), 128)

    def fit_bytes(tn, tv, wbufs):
        nr_ = _round_up(N, tn) // tn
        hblk = 2 * tn * _round_up(D, 128) * h_isz            # hidden, double-buffered
        wblk = wbufs * _round_up(D, 32) * tv * w_isz          # weight tile(s)
        small = 4 * _round_up(tn, 8) * 128 * 4                # labels + loss blocks
        scratch = nr_ * tn * 128 * 4                          # packed running state
        return hblk + wblk + small + scratch

    budget = cap - 8 * _MIB
    weight_buffers = 2
    # Auto-fit: prefer single-buffering the (rarely changing) weight tile, then smaller
    # vocab tiles, then smaller row tiles.
    while fit_bytes(tile_n, tile_v, weight_buffers) > budget:
        if weight_buffers == 2:
            weight_buffers = 1
        elif tile_v > 512:
            tile_v = _round_up(tile_v // 2, 128)
        elif tile_n > 2 * sub_h:
            tile_n = _round_up(tile_n // 2, sub_h)
        else:
            break

    Np = _round_up(N, tile_n)   # padded token count (padded rows get label -100)
    Vp = _round_up(V, tile_v)   # padded vocab size  (padded columns masked to -inf)
    nr = Np // tile_n
    nv = Vp // tile_v

    if Np != N:
        hidden_states = jnp.pad(hidden_states, ((0, Np - N), (0, 0)))
        labels = jnp.pad(labels, (0, Np - N), constant_values=IGNORE_INDEX)
    if Vp != V:
        w_t = jnp.pad(w_t, ((0, 0), (0, Vp - V)))
    labels_2d = labels.reshape(Np, 1).astype(jnp.int32)

    if vmem_limit_bytes is None:
        vmem_limit_bytes = int(min(max(fit_bytes(tile_n, tile_v, weight_buffers)
                                       + 16 * _MIB, 32 * _MIB), cap))

    kernel = functools.partial(_lm_head_loss_kernel,
                               vocab_size=V, mask_vocab=(Vp != V))

    # The weight tile is reused for all nr inner steps, so single-buffering it (only when
    # VMEM is tight) exposes ~1/nr of an outer step of DMA while halving its footprint.
    if weight_buffers == 1:
        w_spec = pl.BlockSpec((D, tile_v), lambda v, r: (0, v),
                              pipeline_mode=pl.Buffered(1))
    else:
        w_spec = pl.BlockSpec((D, tile_v), lambda v, r: (0, v))

    cost = pl.CostEstimate(
        flops=2 * Np * D * Vp,
        transcendentals=Np * Vp,
        bytes_accessed=int(Vp * D * w_isz            # weights streamed once
                           + nv * Np * D * h_isz     # hidden re-streamed per vocab tile
                           + nv * Np * 8),           # labels + per-row loss writebacks
    )

    def run(sem):
        return pl.pallas_call(
            kernel,
            out_shape=jax.ShapeDtypeStruct((Np, 1), jnp.float32),
            grid_spec=pltpu.PrefetchScalarGridSpec(
                num_scalar_prefetch=0,
                grid=(nv, nr),
                in_specs=[
                    pl.BlockSpec((tile_n, 1), lambda v, r: (r, 0)),   # labels
                    pl.BlockSpec((tile_n, D), lambda v, r: (r, 0)),   # hidden row tile
                    w_spec,                                           # weight col tile
                ],
                out_specs=pl.BlockSpec((tile_n, 1), lambda v, r: (r, 0)),
                scratch_shapes=[
                    # packed running state: lanes 0/1/2 = max / sum-exp / target-logit
                    pltpu.VMEM((nr, tile_n, 128), jnp.float32),
                ],
            ),
            compiler_params=pltpu.CompilerParams(
                dimension_semantics=sem,
                vmem_limit_bytes=int(vmem_limit_bytes),
            ),
            cost_estimate=cost,
        )(labels_2d, hidden_states, w_t)

    if dimension_semantics is not None:
        per_row = run(tuple(dimension_semantics))
    else:
        try:
            # Row tiles are independent -> "parallel" lets v7x shard them across its two
            # TensorCores; the vocab reduction axis stays "arbitrary".
            per_row = run(("arbitrary", "parallel"))
        except Exception:
            # TODO(synk): fall back if this Mosaic build rejects a parallel axis after an
            # arbitrary one; single-core chips lose nothing from the fallback.
            per_row = run(("arbitrary", "arbitrary"))

    return jnp.sum(per_row[:, 0])


class LMheadWarpper:
    """JAX/Pallas analogue of the PyTorch wrapper (forward only)."""

    def __init__(self, original_weight, compute_dtype=jnp.bfloat16):
        self.LM_head_weight = original_weight
        self.compute_dtype = compute_dtype
        w = jnp.asarray(original_weight)
        if compute_dtype is not None:
            w = w.astype(compute_dtype)
        # Pre-transpose once so the kernel contracts (TN,D) x (D,TV) directly on the MXU
        # with no per-step relayout of the multi-MiB weight tile.
        self._w_t = w.T  # (D, V), materialized eagerly
        # TODO(synk): PyTorch's `weights.count` re-entrancy bookkeeping and the custom
        # autograd backward have no forward-pass equivalent; a training path would need a
        # custom_vjp around this pallas_call (forward only here).

    def forward(self, hidden_states, labels):
        h = jnp.asarray(hidden_states)
        if self.compute_dtype is not None:
            h = h.astype(self.compute_dtype)
        return lm_head_loss(h, labels, self._w_t, weights_transposed=True)

    __call__ = forward


def _reference_loss(hidden_states, labels, weights):
    logits = jnp.dot(hidden_states.astype(jnp.float32),
                     weights.astype(jnp.float32).T)
    lse = jax.scipy.special.logsumexp(logits, axis=-1)
    safe_labels = jnp.clip(labels, 0, weights.shape[0] - 1)
    tgt = jnp.take_along_axis(logits, safe_labels[:, None], axis=-1)[:, 0]
    valid = labels != IGNORE_INDEX
    return jnp.sum(jnp.where(valid, lse - tgt, 0.0))


if __name__ == "__main__":
    # Small, deliberately ragged shapes: N = 4*15 = 60 tokens, hidden = 128, vocab = 300
    # (exercises both row padding and vocab-column masking).
    B, S, D, V = 4, 15, 128, 300
    N = B * S

    key = jax.random.PRNGKey(0)
    k_h, k_w, k_l = jax.random.split(key, 3)

    hidden_states = jax.random.normal(k_h, (B, S, D), dtype=jnp.float32) * 0.5
    weights = jax.random.normal(k_w, (V, D), dtype=jnp.float32) * 0.05
    labels = jax.random.randint(k_l, (B, S), 0, V, dtype=jnp.int32)
    labels = (labels.at[0, 3].set(IGNORE_INDEX)
                    .at[1, 2].set(IGNORE_INDEX)
                    .at[B - 1, S - 1].set(IGNORE_INDEX))

    ref_f32 = _reference_loss(hidden_states.reshape(-1, D), labels.reshape(-1), weights)

    # 1) f32 path, auto-sized tiles (collapses to a 1x1 grid at these toy shapes).
    loss_f32 = jax.block_until_ready(lm_head_loss(hidden_states, labels, weights))
    assert jnp.allclose(loss_f32, ref_f32, rtol=5e-3, atol=1e-1), (loss_f32, ref_f32)

    # 2) explicit small tiles: 3 vocab tiles x 4 row tiles — exercises the multi-tile
    #    online-logsumexp path, the packed state scratch, padded rows and padded vocab.
    loss_tiled = jax.block_until_ready(
        lm_head_loss(hidden_states, labels, weights, tile_n=16, tile_v=128))
    assert jnp.allclose(loss_tiled, ref_f32, rtol=5e-3, atol=1e-1), (loss_tiled, ref_f32)

    # 3) module wrapper: bf16 compute path with the cached pre-transposed weight.
    module = LMheadWarpper(weights)
    loss_bf16 = jax.block_until_ready(module(hidden_states, labels))
    ref_bf16 = _reference_loss(hidden_states.astype(jnp.bfloat16).reshape(-1, D),
                               labels.reshape(-1),
                               weights.astype(jnp.bfloat16))
    assert jnp.allclose(loss_bf16, ref_bf16, rtol=1e-2, atol=5e-1), (loss_bf16, ref_bf16)

    print("KERNEL_OK")
</pallas_src>

<mosaic_0001>
module attributes {stable_mosaic.version = 11 : i64} {
  func.func @_lm_head_loss_kernel(%arg0: i32, %arg1: i32, %arg2: memref<64x1xi32, #tpu.memory_space<vmem>>, %arg3: memref<64x128xf32, #tpu.memory_space<vmem>>, %arg4: memref<128x384xf32, #tpu.memory_space<vmem>>, %arg5: memref<64x1xf32, #tpu.memory_space<vmem>>, %arg6: memref<1x64x128xf32, #tpu.memory_space<vmem>>) attributes {dimension_semantics = [#tpu.dimension_semantics<arbitrary>, #tpu.dimension_semantics<parallel>], iteration_bounds = array<i64: 1, 1>, scalar_prefetch = 0 : i64, scratch_operands = 1 : i64, tpu.core_type = #tpu.core_type<tc>, window_params = [{transform_indices = @transform_0, window_bounds = array<i64: 64, 1>}, {transform_indices = @transform_1, window_bounds = array<i64: 64, 128>}, {transform_indices = @transform_2, window_bounds = array<i64: 128, 384>}, {transform_indices = @transform_3, window_bounds = array<i64: 64, 1>}]} {
    %c0_i32 = arith.constant 0 : i32
    %0 = arith.cmpi eq, %arg0, %c0_i32 : i32
    %1 = arith.extui %0 : i1 to i32
    %c0_i32_0 = arith.constant 0 : i32
    %2 = arith.cmpi ne, %1, %c0_i32_0 : i32
    scf.if %2 {
      %58 = tpu.iota {dimensions = array<i32: 1>} : vector<64x128xi32>
      %c0_i32_29 = arith.constant 0 : i32
      %59 = vector.broadcast %c0_i32_29 : i32 to vector<64x128xi32>
      %60 = arith.cmpi eq, %58, %59 : vector<64x128xi32>
      %cst_30 = arith.constant -1.000000e+30 : f32
      %cst_31 = arith.constant 0.000000e+00 : f32
      %61 = vector.broadcast %cst_30 : f32 to vector<64x128xf32>
      %62 = vector.broadcast %cst_31 : f32 to vector<64x128xf32>
      %63 = arith.select %60, %61, %62 : vector<64x128xi1>, vector<64x128xf32>
      %64 = arith.index_cast %arg1 : i32 to index
      %c0_32 = arith.constant 0 : index
      %c0_33 = arith.constant 0 : index
      %65 = vector.load %arg6[%64, %c0_32, %c0_33] : memref<1x64x128xf32, #tpu.memory_space<vmem>>, vector<1x64x128xf32>
      %66 = vector.shape_cast %65 : vector<1x64x128xf32> to vector<64x128xf32>
      %67 = vector.shape_cast %63 : vector<64x128xf32> to vector<1x64x128xf32>
      tpu.vector_store %arg6[%64, %c0_32, %c0_33], %67 {strides = array<i32>} : memref<1x64x128xf32, #tpu.memory_space<vmem>>, vector<1x64x128xf32>,
    } else {
    }
    %c0 = arith.constant 0 : index
    %c0_1 = arith.constant 0 : index
    %3 = vector.load %arg3[%c0, %c0_1] : memref<64x128xf32, #tpu.memory_space<vmem>>, vector<64x128xf32>
    %c0_2 = arith.constant 0 : index
    %c0_3 = arith.constant 0 : index
    %4 = vector.load %arg4[%c0_2, %c0_3] : memref<128x384xf32, #tpu.memory_space<vmem>>, vector<128x384xf32>
    %cst = arith.constant dense<0.000000e+00> : vector<64x384xf32>
    %5 = tpu.matmul %3, %4, %cst {dimension_numbers = #tpu.dot_dimension_numbers<[1], [0], [0], [1], [0, 0, 1, 1], [], []>} : vector<64x128xf32>, vector<128x384xf32>, vector<64x384xf32> -> vector<64x384xf32>
    %c384_i32 = arith.constant 384 : i32
    %6 = arith.muli %arg0, %c384_i32 : i32
    %c300_i32 = arith.constant 300 : i32
    %7 = arith.subi %c300_i32, %6 : i32
    %8 = tpu.iota {dimensions = array<i32: 1>} : vector<1x384xi32>
    %9 = vector.broadcast %7 : i32 to vector<1x384xi32>
    %10 = arith.cmpi slt, %8, %9 : vector<1x384xi32>
    %cst_4 = arith.constant 0.000000e+00 : f32
    %cst_5 = arith.constant -1.000000e+30 : f32
    %11 = vector.broadcast %cst_4 : f32 to vector<1x384xf32>
    %12 = vector.broadcast %cst_5 : f32 to vector<1x384xf32>
    %13 = arith.select %10, %11, %12 : vector<1x384xi1>, vector<1x384xf32>
    %14 = vector.broadcast %13 : vector<1x384xf32> to vector<64x384xf32>
    %15 = arith.addf %5, %14 : vector<64x384xf32>
    %c0_6 = arith.constant 0 : index
    %c0_7 = arith.constant 0 : index
    %16 = vector.load %arg2[%c0_6, %c0_7] : memref<64x1xi32, #tpu.memory_space<vmem>>, vector<64x1xi32>
    %c384_i32_8 = arith.constant 384 : i32
    %17 = arith.muli %arg0, %c384_i32_8 : i32
    %18 = vector.broadcast %17 : i32 to vector<64x1xi32>
    %19 = arith.subi %16, %18 : vector<64x1xi32>
    %20 = tpu.iota {dimensions = array<i32: 1>} : vector<64x384xi32>
    %c0_i32_9 = arith.constant 0 : i32
    %c0_i32_10 = arith.constant 0 : i32
    %21 = tpu.memref_slice %arg6[%arg1, %c0_i32_9, %c0_i32_10] : memref<1x64x128xf32, #tpu.memory_space<vmem>> -> memref<1x64x128xf32, #tpu.memory_space<vmem>>
    %22 = tpu.memref_squeeze %21 : memref<1x64x128xf32, #tpu.memory_space<vmem>> -> memref<64x128xf32, #tpu.memory_space<vmem>>
    %c0_11 = arith.constant 0 : index
    %c0_12 = arith.constant 0 : index
    %23 = vector.load %22[%c0_11, %c0_12] : memref<64x128xf32, #tpu.memory_space<vmem>>, vector<64x3xf32>
    %24 = vector.extract_strided_slice %23 {offsets = [0, 0], sizes = [64, 1], strides = [1, 1]} : vector<64x3xf32> to vector<64x1xf32>
    %25 = vector.extract_strided_slice %23 {offsets = [0, 1], sizes = [64, 1], strides = [1, 1]} : vector<64x3xf32> to vector<64x1xf32>
    %26 = vector.extract_strided_slice %23 {offsets = [0, 2], sizes = [64, 1], strides = [1, 1]} : vector<64x3xf32> to vector<64x1xf32>
    %27 = vector.broadcast %19 : vector<64x1xi32> to vector<64x384xi32>
    %28 = arith.cmpi eq, %20, %27 : vector<64x384xi32>
    %cst_13 = arith.constant 0.000000e+00 : f32
    %29 = vector.broadcast %cst_13 : f32 to vector<64x384xf32>
    %30 = arith.select %28, %15, %29 : vector<64x384xi1>, vector<64x384xf32>
    %cst_14 = arith.constant dense<0.000000e+00> : vector<64xf32>
    %31 = vector.multi_reduction <add>, %30, %cst_14 [1] : vector<64x384xf32> to vector<64xf32>
    %32 = vector.shape_cast %31 : vector<64xf32> to vector<64x1xf32>
    %33 = arith.addf %26, %32 : vector<64x1xf32>
    %cst_15 = arith.constant dense<0xFF800000> : vector<64xf32>
    %34 = vector.multi_reduction <maximumf>, %15, %cst_15 [1] : vector<64x384xf32> to vector<64xf32>
    %35 = vector.shape_cast %34 : vector<64xf32> to vector<64x1xf32>
    %36 = arith.maximumf %24, %35 : vector<64x1xf32>
    %37 = arith.subf %24, %36 : vector<64x1xf32>
    %38 = math.exp %37 : vector<64x1xf32>
    %39 = arith.mulf %38, %25 : vector<64x1xf32>
    %40 = vector.broadcast %36 : vector<64x1xf32> to vector<64x384xf32>
    %41 = arith.subf %15, %40 : vector<64x384xf32>
    %42 = math.exp %41 : vector<64x384xf32>
    %cst_16 = arith.constant dense<0.000000e+00> : vector<64xf32>
    %43 = vector.multi_reduction <add>, %42, %cst_16 [1] : vector<64x384xf32> to vector<64xf32>
    %44 = vector.shape_cast %43 : vector<64xf32> to vector<64x1xf32>
    %45 = arith.addf %39, %44 : vector<64x1xf32>
    %c0_i32_17 = arith.constant 0 : i32
    %c0_i32_18 = arith.constant 0 : i32
    %46 = tpu.memref_slice %arg6[%arg1, %c0_i32_17, %c0_i32_18] : memref<1x64x128xf32, #tpu.memory_space<vmem>> -> memref<1x64x128xf32, #tpu.memory_space<vmem>>
    %47 = tpu.memref_squeeze %46 : memref<1x64x128xf32, #tpu.memory_space<vmem>> -> memref<64x128xf32, #tpu.memory_space<vmem>>
    %c0_19 = arith.constant 0 : index
    %c0_20 = arith.constant 0 : index
    %48 = vector.load %47[%c0_19, %c0_20] : memref<64x128xf32, #tpu.memory_space<vmem>>, vector<64x1xf32>
    tpu.vector_store %47[%c0_19, %c0_20], %36 {strides = array<i32>} : memref<64x128xf32, #tpu.memory_space<vmem>>, vector<64x1xf32>,
    %c0_i32_21 = arith.constant 0 : i32
    %c0_i32_22 = arith.constant 0 : i32
    %49 = tpu.memref_slice %arg6[%arg1, %c0_i32_21, %c0_i32_22] : memref<1x64x128xf32, #tpu.memory_space<vmem>> -> memref<1x64x128xf32, #tpu.memory_space<vmem>>
    %50 = tpu.memref_squeeze %49 : memref<1x64x128xf32, #tpu.memory_space<vmem>> -> memref<64x128xf32, #tpu.memory_space<vmem>>
    %c0_23 = arith.constant 0 : index
    %c1 = arith.constant 1 : index
    %51 = vector.load %50[%c0_23, %c1] : memref<64x128xf32, #tpu.memory_space<vmem>>, vector<64x1xf32>
    tpu.vector_store %50[%c0_23, %c1], %45 {strides = array<i32>} : memref<64x128xf32, #tpu.memory_space<vmem>>, vector<64x1xf32>,
    %c0_i32_24 = arith.constant 0 : i32
    %c0_i32_25 = arith.constant 0 : i32
    %52 = tpu.memref_slice %arg6[%arg1, %c0_i32_24, %c0_i32_25] : memref<1x64x128xf32, #tpu.memory_space<vmem>> -> memref<1x64x128xf32, #tpu.memory_space<vmem>>
    %53 = tpu.memref_squeeze %52 : memref<1x64x128xf32, #tpu.memory_space<vmem>> -> memref<64x128xf32, #tpu.memory_space<vmem>>
    %c0_26 = arith.constant 0 : index
    %c2 = arith.constant 2 : index
    %54 = vector.load %53[%c0_26, %c2] : memref<64x128xf32, #tpu.memory_space<vmem>>, vector<64x1xf32>
    tpu.vector_store %53[%c0_26, %c2], %33 {strides = array<i32>} : memref<64x128xf32, #tpu.memory_space<vmem>>, vector<64x1xf32>,
    %c0_i32_27 = arith.constant 0 : i32
    %55 = arith.cmpi eq, %arg0, %c0_i32_27 : i32
    %56 = arith.extui %55 : i1 to i32
    %c0_i32_28 = arith.constant 0 : i32
    %57 = arith.cmpi ne, %56, %c0_i32_28 : i32
    scf.if %57 {
      %c-100_i32 = arith.constant -100 : i32
      %58 = vector.broadcast %c-100_i32 : i32 to vector<64x1xi32>
      %59 = arith.cmpi ne, %16, %58 : vector<64x1xi32>
      %60 = arith.extui %59 : vector<64x1xi1> to vector<64x1xi32>
      %61 = arith.sitofp %60 : vector<64x1xi32> to vector<64x1xf32>
      %62 = math.log %45 : vector<64x1xf32>
      %63 = arith.addf %36, %62 : vector<64x1xf32>
      %64 = arith.subf %63, %33 : vector<64x1xf32>
      %65 = arith.mulf %64, %61 : vector<64x1xf32>
      %c0_29 = arith.constant 0 : index
      %c0_30 = arith.constant 0 : index
      %66 = vector.load %arg5[%c0_29, %c0_30] : memref<64x1xf32, #tpu.memory_space<vmem>>, vector<64x1xf32>
      tpu.vector_store %arg5[%c0_29, %c0_30], %65 {strides = array<i32>} : memref<64x1xf32, #tpu.memory_space<vmem>>, vector<64x1xf32>,
    } else {
    }
    return
  }
  func.func @transform_0(%arg0: i32, %arg1: i32) -> (i32, i32) {
    %c0_i32 = arith.constant 0 : i32
    %c0_i32_0 = arith.constant 0 : i32
    return %arg1, %c0_i32 : i32, i32
  }
  func.func @transform_1(%arg0: i32, %arg1: i32) -> (i32, i32) {
    %c0_i32 = arith.constant 0 : i32
    %c0_i32_0 = arith.constant 0 : i32
    return %arg1, %c0_i32 : i32, i32
  }
  func.func @transform_2(%arg0: i32, %arg1: i32) -> (i32, i32) {
    %c0_i32 = arith.constant 0 : i32
    %c0_i32_0 = arith.constant 0 : i32
    return %c0_i32, %arg0 : i32, i32
  }
  func.func @transform_3(%arg0: i32, %arg1: i32) -> (i32, i32) {
    %c0_i32 = arith.constant 0 : i32
    %c0_i32_0 = arith.constant 0 : i32
    return %arg1, %c0_i32 : i32, i32
  }
}

module attributes {stable_mosaic.version = 11 : i64} {
  func.func @_lm_head_loss_kernel(%arg0: i32, %arg1: i32, %arg2: memref<64x1xi32, #tpu.memory_space<vmem>>, %arg3: memref<64x128xf32, #tpu.memory_space<vmem>>, %arg4: memref<128x384xf32, #tpu.memory_space<vmem>>, %arg5: memref<64x1xf32, #tpu.memory_space<vmem>>, %arg6: memref<1x64x128xf32, #tpu.memory_space<vmem>>) attributes {dimension_semantics = [#tpu.dimension_semantics<arbitrary>, #tpu.dimension_semantics<arbitrary>], iteration_bounds = array<i64: 1, 1>, scalar_prefetch = 0 : i64, scratch_operands = 1 : i64, tpu.core_type = #tpu.core_type<tc>, window_params = [{transform_indices = @transform_0, window_bounds = array<i64: 64, 1>}, {transform_indices = @transform_1, window_bounds = array<i64: 64, 128>}, {transform_indices = @transform_2, window_bounds = array<i64: 128, 384>}, {transform_indices = @transform_3, window_bounds = array<i64: 64, 1>}]} {
    %c0_i32 = arith.constant 0 : i32
    %0 = arith.cmpi eq, %arg0, %c0_i32 : i32
    %1 = arith.extui %0 : i1 to i32
    %c0_i32_0 = arith.constant 0 : i32
    %2 = arith.cmpi ne, %1, %c0_i32_0 : i32
    scf.if %2 {
      %58 = tpu.iota {dimensions = array<i32: 1>} : vector<64x128xi32>
      %c0_i32_29 = arith.constant 0 : i32
      %59 = vector.broadcast %c0_i32_29 : i32 to vector<64x128xi32>
      %60 = arith.cmpi eq, %58, %59 : vector<64x128xi32>
      %cst_30 = arith.constant -1.000000e+30 : f32
      %cst_31 = arith.constant 0.000000e+00 : f32
      %61 = vector.broadcast %cst_30 : f32 to vector<64x128xf32>
      %62 = vector.broadcast %cst_31 : f32 to vector<64x128xf32>
      %63 = arith.select %60, %61, %62 : vector<64x128xi1>, vector<64x128xf32>
      %64 = arith.index_cast %arg1 : i32 to index
      %c0_32 = arith.constant 0 : index
      %c0_33 = arith.constant 0 : index
      %65 = vector.load %arg6[%64, %c0_32, %c0_33] : memref<1x64x128xf32, #tpu.memory_space<vmem>>, vector<1x64x128xf32>
      %66 = vector.shape_cast %65 : vector<1x64x128xf32> to vector<64x128xf32>
      %67 = vector.shape_cast %63 : vector<64x128xf32> to vector<1x64x128xf32>
      tpu.vector_store %arg6[%64, %c0_32, %c0_33], %67 {strides = array<i32>} : memref<1x64x128xf32, #tpu.memory_space<vmem>>, vector<1x64x128xf32>,
    } else {
    }
    %c0 = arith.constant 0 : index
    %c0_1 = arith.constant 0 : index
    %3 = vector.load %arg3[%c0, %c0_1] : memref<64x128xf32, #tpu.memory_space<vmem>>, vector<64x128xf32>
    %c0_2 = arith.constant 0 : index
    %c0_3 = arith.constant 0 : index
    %4 = vector.load %arg4[%c0_2, %c0_3] : memref<128x384xf32, #tpu.memory_space<vmem>>, vector<128x384xf32>
    %cst = arith.constant dense<0.000000e+00> : vector<64x384xf32>
    %5 = tpu.matmul %3, %4, %cst {dimension_numbers = #tpu.dot_dimension_numbers<[1], [0], [0], [1], [0, 0, 1, 1], [], []>} : vector<64x128xf32>, vector<128x384xf32>, vector<64x384xf32> -> vector<64x384xf32>
    %c384_i32 = arith.constant 384 : i32
    %6 = arith.muli %arg0, %c384_i32 : i32
    %c300_i32 = arith.constant 300 : i32
    %7 = arith.subi %c300_i32, %6 : i32
    %8 = tpu.iota {dimensions = array<i32: 1>} : vector<1x384xi32>
    %9 = vector.broadcast %7 : i32 to vector<1x384xi32>
    %10 = arith.cmpi slt, %8, %9 : vector<1x384xi32>
    %cst_4 = arith.constant 0.000000e+00 : f32
    %cst_5 = arith.constant -1.000000e+30 : f32
    %11 = vector.broadcast %cst_4 : f32 to vector<1x384xf32>
    %12 = vector.broadcast %cst_5 : f32 to vector<1x384xf32>
    %13 = arith.select %10, %11, %12 : vector<1x384xi1>, vector<1x384xf32>
    %14 = vector.broadcast %13 : vector<1x384xf32> to vector<64x384xf32>
    %15 = arith.addf %5, %14 : vector<64x384xf32>
    %c0_6 = arith.constant 0 : index
    %c0_7 = arith.constant 0 : index
    %16 = vector.load %arg2[%c0_6, %c0_7] : memref<64x1xi32, #tpu.memory_space<vmem>>, vector<64x1xi32>
    %c384_i32_8 = arith.constant 384 : i32
    %17 = arith.muli %arg0, %c384_i32_8 : i32
    %18 = vector.broadcast %17 : i32 to vector<64x1xi32>
    %19 = arith.subi %16, %18 : vector<64x1xi32>
    %20 = tpu.iota {dimensions = array<i32: 1>} : vector<64x384xi32>
    %c0_i32_9 = arith.constant 0 : i32
    %c0_i32_10 = arith.constant 0 : i32
    %21 = tpu.memref_slice %arg6[%arg1, %c0_i32_9, %c0_i32_10] : memref<1x64x128xf32, #tpu.memory_space<vmem>> -> memref<1x64x128xf32, #tpu.memory_space<vmem>>
    %22 = tpu.memref_squeeze %21 : memref<1x64x128xf32, #tpu.memory_space<vmem>> -> memref<64x128xf32, #tpu.memory_space<vmem>>
    %c0_11 = arith.constant 0 : index
    %c0_12 = arith.constant 0 : index
    %23 = vector.load %22[%c0_11, %c0_12] : memref<64x128xf32, #tpu.memory_space<vmem>>, vector<64x3xf32>
    %24 = vector.extract_strided_slice %23 {offsets = [0, 0], sizes = [64, 1], strides = [1, 1]} : vector<64x3xf32> to vector<64x1xf32>
    %25 = vector.extract_strided_slice %23 {offsets = [0, 1], sizes = [64, 1], strides = [1, 1]} : vector<64x3xf32> to vector<64x1xf32>
    %26 = vector.extract_strided_slice %23 {offsets = [0, 2], sizes = [64, 1], strides = [1, 1]} : vector<64x3xf32> to vector<64x1xf32>
    %27 = vector.broadcast %19 : vector<64x1xi32> to vector<64x384xi32>
    %28 = arith.cmpi eq, %20, %27 : vector<64x384xi32>
    %cst_13 = arith.constant 0.000000e+00 : f32
    %29 = vector.broadcast %cst_13 : f32 to vector<64x384xf32>
    %30 = arith.select %28, %15, %29 : vector<64x384xi1>, vector<64x384xf32>
    %cst_14 = arith.constant dense<0.000000e+00> : vector<64xf32>
    %31 = vector.multi_reduction <add>, %30, %cst_14 [1] : vector<64x384xf32> to vector<64xf32>
    %32 = vector.shape_cast %31 : vector<64xf32> to vector<64x1xf32>
    %33 = arith.addf %26, %32 : vector<64x1xf32>
    %cst_15 = arith.constant dense<0xFF800000> : vector<64xf32>
    %34 = vector.multi_reduction <maximumf>, %15, %cst_15 [1] : vector<64x384xf32> to vector<64xf32>
    %35 = vector.shape_cast %34 : vector<64xf32> to vector<64x1xf32>
    %36 = arith.maximumf %24, %35 : vector<64x1xf32>
    %37 = arith.subf %24, %36 : vector<64x1xf32>
    %38 = math.exp %37 : vector<64x1xf32>
    %39 = arith.mulf %38, %25 : vector<64x1xf32>
    %40 = vector.broadcast %36 : vector<64x1xf32> to vector<64x384xf32>
    %41 = arith.subf %15, %40 : vector<64x384xf32>
    %42 = math.exp %41 : vector<64x384xf32>
    %cst_16 = arith.constant dense<0.000000e+00> : vector<64xf32>
    %43 = vector.multi_reduction <add>, %42, %cst_16 [1] : vector<64x384xf32> to vector<64xf32>
    %44 = vector.shape_cast %43 : vector<64xf32> to vector<64x1xf32>
    %45 = arith.addf %39, %44 : vector<64x1xf32>
    %c0_i32_17 = arith.constant 0 : i32
    %c0_i32_18 = arith.constant 0 : i32
    %46 = tpu.memref_slice %arg6[%arg1, %c0_i32_17, %c0_i32_18] : memref<1x64x128xf32, #tpu.memory_space<vmem>> -> memref<1x64x128xf32, #tpu.memory_space<vmem>>
    %47 = tpu.memref_squeeze %46 : memref<1x64x128xf32, #tpu.memory_space<vmem>> -> memref<64x128xf32, #tpu.memory_space<vmem>>
    %c0_19 = arith.constant 0 : index
    %c0_20 = arith.constant 0 : index
    %48 = vector.load %47[%c0_19, %c0_20] : memref<64x128xf32, #tpu.memory_space<vmem>>, vector<64x1xf32>
    tpu.vector_store %47[%c0_19, %c0_20], %36 {strides = array<i32>} : memref<64x128xf32, #tpu.memory_space<vmem>>, vector<64x1xf32>,
    %c0_i32_21 = arith.constant 0 : i32
    %c0_i32_22 = arith.constant 0 : i32
    %49 = tpu.memref_slice %arg6[%arg1, %c0_i32_21, %c0_i32_22] : memref<1x64x128xf32, #tpu.memory_space<vmem>> -> memref<1x64x128xf32, #tpu.memory_space<vmem>>
    %50 = tpu.memref_squeeze %49 : memref<1x64x128xf32, #tpu.memory_space<vmem>> -> memref<64x128xf32, #tpu.memory_space<vmem>>
    %c0_23 = arith.constant 0 : index
    %c1 = arith.constant 1 : index
    %51 = vector.load %50[%c0_23, %c1] : memref<64x128xf32, #tpu.memory_space<vmem>>, vector<64x1xf32>
    tpu.vector_store %50[%c0_23, %c1], %45 {strides = array<i32>} : memref<64x128xf32, #tpu.memory_space<vmem>>, vector<64x1xf32>,
    %c0_i32_24 = arith.constant 0 : i32
    %c0_i32_25 = arith.constant 0 : i32
    %52 = tpu.memref_slice %arg6[%arg1, %c0_i32_24, %c0_i32_25] : memref<1x64x128xf32, #tpu.memory_space<vmem>> -> memref<1x64x128xf32, #tpu.memory_space<vmem>>
    %53 = tpu.memref_squeeze %52 : memref<1x64x128xf32, #tpu.memory_space<vmem>> -> memref<64x128xf32, #tpu.memory_space<vmem>>
    %c0_26 = arith.constant 0 : index
    %c2 = arith.constant 2 : index
    %54 = vector.load %53[%c0_26, %c2] : memref<64x128xf32, #tpu.memory_space<vmem>>, vector<64x1xf32>
    tpu.vector_store %53[%c0_26, %c2], %33 {strides = array<i32>} : memref<64x128xf32, #tpu.memory_space<vmem>>, vector<64x1xf32>,
    %c0_i32_27 = arith.constant 0 : i32
    %55 = arith.cmpi eq, %arg0, %c0_i32_27 : i32
    %56 = arith.extui %55 : i1 to i32
    %c0_i32_28 = arith.constant 0 : i32
    %57 = arith.cmpi ne, %56, %c0_i32_28 : i32
    scf.if %57 {
      %c-100_i32 = arith.constant -100 : i32
      %58 = vector.broadcast %c-100_i32 : i32 to vector<64x1xi32>
      %59 = arith.cmpi ne, %16, %58 : vector<64x1xi32>
      %60 = arith.extui %59 : vector<64x1xi1> to vector<64x1xi32>
      %61 = arith.sitofp %60 : vector<64x1xi32> to vector<64x1xf32>
      %62 = math.log %45 : vector<64x1xf32>
      %63 = arith.addf %36, %62 : vector<64x1xf32>
      %64 = arith.subf %63, %33 : vector<64x1xf32>
      %65 = arith.mulf %64, %61 : vector<64x1xf32>
      %c0_29 = arith.constant 0 : index
      %c0_30 = arith.constant 0 : index
      %66 = vector.load %arg5[%c0_29, %c0_30] : memref<64x1xf32, #tpu.memory_space<vmem>>, vector<64x1xf32>
      tpu.vector_store %arg5[%c0_29, %c0_30], %65 {strides = array<i32>} : memref<64x1xf32, #tpu.memory_space<vmem>>, vector<64x1xf32>,
    } else {
    }
    return
  }
  func.func @transform_0(%arg0: i32, %arg1: i32) -> (i32, i32) {
    %c0_i32 = arith.constant 0 : i32
    %c0_i32_0 = arith.constant 0 : i32
    return %arg1, %c0_i32 : i32, i32
  }
  func.func @transform_1(%arg0: i32, %arg1: i32) -> (i32, i32) {
    %c0_i32 = arith.constant 0 : i32
    %c0_i32_0 = arith.constant 0 : i32
    return %arg1, %c0_i32 : i32, i32
  }
  func.func @transform_2(%arg0: i32, %arg1: i32) -> (i32, i32) {
    %c0_i32 = arith.constant 0 : i32
    %c0_i32_0 = arith.constant 0 : i32
    return %c0_i32, %arg0 : i32, i32
  }
  func.func @transform_3(%arg0: i32, %arg1: i32) -> (i32, i32) {
    %c0_i32 = arith.constant 0 : i32
    %c0_i32_0 = arith.constant 0 : i32
    return %arg1, %c0_i32 : i32, i32
  }
}

</mosaic_0001>

<llo_original>
// kernel: tpu_custom_call.1
$region0: #{tpu_custom_call.1}
  #allocation0 [shape = 'u32[]', space=smem, size = 0x4, offset = 0x4, fixed_abs, tag = 'smem constant byte address 0x4 - core index']
  #allocation1 [shape = 'u32[72,128]{1,0:T(1,128)}', space=vmem, size = 0x9000, scoped, tag = 'internal scratch']
  #allocation2 [shape = 'f32[1,64,128]{2,1,0:T(8,128)}', space=vmem, size = 0x8000, scoped, tag = 'scratch operand']
  %s0 = inlined_call_operand.vmem [shape: s32[64,1], index: 0, kind: input, shape index: {}]
  %s1 = inlined_call_operand.vmem [shape: f32[64,128], index: 1, kind: input, shape index: {}]
  %s2 = inlined_call_operand.hbm [shape: f32[128,384], index: 2, kind: input, shape index: {}]
  %s3 = inlined_call_operand.vmem [shape: f32[64,1], index: 3, kind: output, shape index: {}]
  %s4 = sld [smem:[#allocation0]]
  $region34: #{tpu_custom_call.1} parent=0
    _
  %s6 = ssub.s32 1, %s4
  %s7 = scalar_select 0, %s6, %s4
  $region1: #{tpu_custom_call.1} parent=0
    #allocation3 [shape = 'u8[196608]{0}', space=vmem, size = 0x30000, scoped, tag = 'input window, operand 2, single buffered']
    #allocation4 [shape = 's32[1]{0}', space=sflag, size = 0x4, scoped, tag = 'scoped memory for tpu_custom_call.1']
    %8 = vsyncpa [#allocation4], 0
    // Predicated region
    $region2: #{tpu_custom_call.1} parent=1 // pred_check
      _
    $region3: #{tpu_custom_call.1} parent=1 // pred_check_branch
      %10 = sbr.rel (0) target = $region5
    $region4: #{tpu_custom_call.1} parent=1 // pred_region
      _
    $region5: #{tpu_custom_call.1} parent=1 // pred_fallthru
      _
    // Predicated region
    $region6: #{tpu_custom_call.1} parent=1 // pred_check
      _
    $region7: #{tpu_custom_call.1} parent=1 // pred_check_branch
      %12 = sbr.rel (0) target = $region9
    $region8: #{tpu_custom_call.1} parent=1 // pred_region
      _
    $region9: #{tpu_custom_call.1} parent=1 // pred_fallthru
      _
    // Predicated region
    $region10: #{tpu_custom_call.1} parent=1 // pred_check
      _
    $region11: #{tpu_custom_call.1} parent=1 // pred_check_branch
      %14 = sbr.rel (0) target = $region13
    $region12: #{tpu_custom_call.1} parent=1 // pred_region
      %16 = vsyncadd [#allocation4], 0
      %s17 = sshll.u32 %s2, 4
      %s18 = int_to_ptr.hbm [resolvable:$true] %s17
      %s19 = sshll.u32 [#allocation3], 4
      %s20 = int_to_ptr.vmem [resolvable:$true] %s19
      %25 = dma.hbm_to_vmem [thread:$0]  %s18, 6144, %s20, [#allocation4], 384, 384, 24
    $region13: #{tpu_custom_call.1} parent=1 // pred_fallthru
      _
    // Predicated region
    $region14: #{tpu_custom_call.1} parent=1 // pred_check
      _
    $region15: #{tpu_custom_call.1} parent=1 // pred_check_branch
      %27 = sbr.rel (0) target = $region17
    $region16: #{tpu_custom_call.1} parent=1 // pred_region
      %29 = dma.done [#allocation4], 6144
    $region17: #{tpu_custom_call.1} parent=1 // pred_fallthru
      _
    %p30 = scmp.eq.s32.totalorder 0, 0
    // Predicated region
    $region18: #{tpu_custom_call.1} parent=1 // pred_check
      %p31 = pneg %p30
    $region19: #{tpu_custom_call.1} parent=1 // pred_check_branch
      %33 = sbr.rel (%p31) target = $region21
    $region20: #{tpu_custom_call.1} parent=1 // pred_region
      %v34 = vlaneseq
      %v35 = vand.u32 %v34, 127
      %vm36 = vcmp.eq.s32.totalorder %v35, 0
      %v37 = vsel %vm36, -1e+30, 0.0
      %s38 = smul.u32 0, 64
      %s39 = scalar_lea.vmem [#allocation2], %s38
      %40 = vst [vmem:[%s39] sm:$0xff] %v37
      %41 = vst [vmem:[%s39 + $0x8] sm:$0xff] %v37
      %42 = vst [vmem:[%s39 + $0x10] sm:$0xff] %v37
      %43 = vst [vmem:[%s39 + $0x18] sm:$0xff] %v37
      %44 = vst [vmem:[%s39 + $0x20] sm:$0xff] %v37
      %45 = vst [vmem:[%s39 + $0x28] sm:$0xff] %v37
      %46 = vst [vmem:[%s39 + $0x30] sm:$0xff] %v37
      %47 = vst [vmem:[%s39 + $0x38] sm:$0xff] %v37
    $region21: #{tpu_custom_call.1} parent=1 // pred_fallthru
      _
    %v48 = vld [vmem:[%s1] sm:$0xff]
    %v49 = vld [vmem:[%s1 + $0x8] sm:$0xff]
    %v50 = vld [vmem:[%s1 + $0x10] sm:$0xff]
    %v51 = vld [vmem:[%s1 + $0x18] sm:$0xff]
    %v52 = vld [vmem:[%s1 + $0x20] sm:$0xff]
    %v53 = vld [vmem:[%s1 + $0x28] sm:$0xff]
    %v54 = vld [vmem:[%s1 + $0x30] sm:$0xff]
    %v55 = vld [vmem:[%s1 + $0x38] sm:$0xff]
    %v56 = vld [vmem:[#allocation3] sm:$0xff]
    %v57 = vld [vmem:[#allocation3 + $0x8] sm:$0xff]
    %v58 = vld [vmem:[#allocation3 + $0x10] sm:$0xff]
    %v59 = vld [vmem:[#allocation3 + $0x18] sm:$0xff]
    %v60 = vld [vmem:[#allocation3 + $0x20] sm:$0xff]
    %v61 = vld [vmem:[#allocation3 + $0x28] sm:$0xff]
    %v62 = vld [vmem:[#allocation3 + $0x30] sm:$0xff]
    %v63 = vld [vmem:[#allocation3 + $0x38] sm:$0xff]
    %v64 = vld [vmem:[#allocation3 + $0x40] sm:$0xff]
    %v65 = vld [vmem:[#allocation3 + $0x48] sm:$0xff]
    %v66 = vld [vmem:[#allocation3 + $0x50] sm:$0xff]
    %v67 = vld [vmem:[#allocation3 + $0x58] sm:$0xff]
    %v68 = vld [vmem:[#allocation3 + $0x60] sm:$0xff]
    %v69 = vld [vmem:[#allocation3 + $0x68] sm:$0xff]
    %v70 = vld [vmem:[#allocation3 + $0x70] sm:$0xff]
    %v71 = vld [vmem:[#allocation3 + $0x78] sm:$0xff]
    %v72 = vld [vmem:[#allocation3 + $0x80] sm:$0xff]
    %v73 = vld [vmem:[#allocation3 + $0x88] sm:$0xff]
    %v74 = vld [vmem:[#allocation3 + $0x90] sm:$0xff]
    %v75 = vld [vmem:[#allocation3 + $0x98] sm:$0xff]
    %v76 = vld [vmem:[#allocation3 + $0xa0] sm:$0xff]
    %v77 = vld [vmem:[#allocation3 + $0xa8] sm:$0xff]
    %v78 = vld [vmem:[#allocation3 + $0xb0] sm:$0xff]
    %v79 = vld [vmem:[#allocation3 + $0xb8] sm:$0xff]
    %v80 = vld [vmem:[#allocation3 + $0xc0] sm:$0xff]
    %v81 = vld [vmem:[#allocation3 + $0xc8] sm:$0xff]
    %v82 = vld [vmem:[#allocation3 + $0xd0] sm:$0xff]
    %v83 = vld [vmem:[#allocation3 + $0xd8] sm:$0xff]
    %v84 = vld [vmem:[#allocation3 + $0xe0] sm:$0xff]
    %v85 = vld [vmem:[#allocation3 + $0xe8] sm:$0xff]
    %v86 = vld [vmem:[#allocation3 + $0xf0] sm:$0xff]
    %v87 = vld [vmem:[#allocation3 + $0xf8] sm:$0xff]
    %v88 = vld [vmem:[#allocation3 + $0x100] sm:$0xff]
    %v89 = vld [vmem:[#allocation3 + $0x108] sm:$0xff]
    %v90 = vld [vmem:[#allocation3 + $0x110] sm:$0xff]
    %v91 = vld [vmem:[#allocation3 + $0x118] sm:$0xff]
    %v92 = vld [vmem:[#allocation3 + $0x120] sm:$0xff]
    %v93 = vld [vmem:[#allocation3 + $0x128] sm:$0xff]
    %v94 = vld [vmem:[#allocation3 + $0x130] sm:$0xff]
    %v95 = vld [vmem:[#allocation3 + $0x138] sm:$0xff]
    %v96 = vld [vmem:[#allocation3 + $0x140] sm:$0xff]
    %v97 = vld [vmem:[#allocation3 + $0x148] sm:$0xff]
    %v98 = vld [vmem:[#allocation3 + $0x150] sm:$0xff]
    %v99 = vld [vmem:[#allocation3 + $0x158] sm:$0xff]
    %v100 = vld [vmem:[#allocation3 + $0x160] sm:$0xff]
    %v101 = vld [vmem:[#allocation3 + $0x168] sm:$0xff]
    %v102 = vld [vmem:[#allocation3 + $0x170] sm:$0xff]
    %v103 = vld [vmem:[#allocation3 + $0x178] sm:$0xff]
    %s104 = smul.u32 0, 384
    %s105 = ssub.s32 300, %s104
    %v106 = vlaneseq
    %v107 = vand.u32 %v106, 127
    %v108 = vadd.s32 %v107, 128
    %v109 = vadd.s32 %v107, 256
    %v110 = vstv %s105
    %vm111 = vcmp.lt.s32.totalorder %v107, %v110
    %vm112 = vcmp.lt.s32.totalorder %v108, %v110
    %vm113 = vcmp.lt.s32.totalorder %v109, %v110
    %v114 = vsel %vm111, 0.0, -1e+30
    %v115 = vsel %vm112, 0.0, -1e+30
    %v116 = vsel %vm113, 0.0, -1e+30
    %117 = vmatpush.msra.mxu0 %v101
    %118 = vmatpush.msra.mxu0 %v98
    %119 = vmatpush.msra.mxu0 %v95
    %120 = vmatpush.msra.mxu0 %v92
    %121 = vmatpush.msra.mxu0 %v89
    %122 = vmatpush.msra.mxu0 %v86
    %123 = vmatpush.msra.mxu0 %v83
    %124 = vmatpush.msra.mxu0 %v80
    %125 = vmatpush.msra.mxu0 %v77
    %126 = vmatpush.msra.mxu0 %v74
    %127 = vmatpush.msra.mxu0 %v71
    %128 = vmatpush.msra.mxu0 %v68
    %129 = vmatpush.msra.mxu0 %v65
    %130 = vmatpush.msra.mxu0 %v62
    %131 = vmatpush.msra.mxu0 %v59
    %132 = vmatpush.msra.mxu0 %v56
    %133 = vmatmul.f32.gmra.mxu0 %v48
    %v134 = vpop.f32.mrf.mxu0
    %v135 = vadd.f32 %v114, %v134
    %136 = vmatmul.f32.gmra.mxu0 %v49
    %v137 = vpop.f32.mrf.mxu0
    %v138 = vadd.f32 %v114, %v137
    %139 = vmatmul.f32.gmra.mxu0 %v50
    %v140 = vpop.f32.mrf.mxu0
    %v141 = vadd.f32 %v114, %v140
    %142 = vmatmul.f32.gmra.mxu0 %v51
    %v143 = vpop.f32.mrf.mxu0
    %v144 = vadd.f32 %v114, %v143
    %145 = vmatmul.f32.gmra.mxu0 %v52
    %v146 = vpop.f32.mrf.mxu0
    %v147 = vadd.f32 %v114, %v146
    %148 = vmatmul.f32.gmra.mxu0 %v53
    %v149 = vpop.f32.mrf.mxu0
    %v150 = vadd.f32 %v114, %v149
    %151 = vmatmul.f32.gmra.mxu0 %v54
    %v152 = vpop.f32.mrf.mxu0
    %v153 = vadd.f32 %v114, %v152
    %154 = vmatmul.f32.gmra.mxu0 %v55
    %v155 = vpop.f32.mrf.mxu0
    %v156 = vadd.f32 %v114, %v155
    %157 = vdwg.mxu0
    %158 = vmatpush.msra.mxu0 %v102
    %159 = vmatpush.msra.mxu0 %v99
    %160 = vmatpush.msra.mxu0 %v96
    %161 = vmatpush.msra.mxu0 %v93
    %162 = vmatpush.msra.mxu0 %v90
    %163 = vmatpush.msra.mxu0 %v87
    %164 = vmatpush.msra.mxu0 %v84
    %165 = vmatpush.msra.mxu0 %v81
    %166 = vmatpush.msra.mxu0 %v78
    %167 = vmatpush.msra.mxu0 %v75
    %168 = vmatpush.msra.mxu0 %v72
    %169 = vmatpush.msra.mxu0 %v69
    %170 = vmatpush.msra.mxu0 %v66
    %171 = vmatpush.msra.mxu0 %v63
    %172 = vmatpush.msra.mxu0 %v60
    %173 = vmatpush.msra.mxu0 %v57
    %174 = vmatmul.f32.gmra.mxu0 %v48
    %v175 = vpop.f32.mrf.mxu0
    %v176 = vadd.f32 %v115, %v175
    %177 = vmatmul.f32.gmra.mxu0 %v49
    %v178 = vpop.f32.mrf.mxu0
    %v179 = vadd.f32 %v115, %v178
    %180 = vmatmul.f32.gmra.mxu0 %v50
    %v181 = vpop.f32.mrf.mxu0
    %v182 = vadd.f32 %v115, %v181
    %183 = vmatmul.f32.gmra.mxu0 %v51
    %v184 = vpop.f32.mrf.mxu0
    %v185 = vadd.f32 %v115, %v184
    %186 = vmatmul.f32.gmra.mxu0 %v52
    %v187 = vpop.f32.mrf.mxu0
    %v188 = vadd.f32 %v115, %v187
    %189 = vmatmul.f32.gmra.mxu0 %v53
    %v190 = vpop.f32.mrf.mxu0
    %v191 = vadd.f32 %v115, %v190
    %192 = vmatmul.f32.gmra.mxu0 %v54
    %v193 = vpop.f32.mrf.mxu0
    %v194 = vadd.f32 %v115, %v193
    %195 = vmatmul.f32.gmra.mxu0 %v55
    %v196 = vpop.f32.mrf.mxu0
    %v197 = vadd.f32 %v115, %v196
    %198 = vdwg.mxu0
    %199 = vmatpush.msra.mxu0 %v103
    %200 = vmatpush.msra.mxu0 %v100
    %201 = vmatpush.msra.mxu0 %v97
    %202 = vmatpush.msra.mxu0 %v94
    %203 = vmatpush.msra.mxu0 %v91
    %204 = vmatpush.msra.mxu0 %v88
    %205 = vmatpush.msra.mxu0 %v85
    %206 = vmatpush.msra.mxu0 %v82
    %207 = vmatpush.msra.mxu0 %v79
    %208 = vmatpush.msra.mxu0 %v76
    %209 = vmatpush.msra.mxu0 %v73
    %210 = vmatpush.msra.mxu0 %v70
    %211 = vmatpush.msra.mxu0 %v67
    %212 = vmatpush.msra.mxu0 %v64
    %213 = vmatpush.msra.mxu0 %v61
    %214 = vmatpush.msra.mxu0 %v58
    %215 = vmatmul.f32.gmra.mxu0 %v48
    %v216 = vpop.f32.mrf.mxu0
    %v217 = vadd.f32 %v116, %v216
    %218 = vmatmul.f32.gmra.mxu0 %v49
    %v219 = vpop.f32.mrf.mxu0
    %v220 = vadd.f32 %v116, %v219
    %221 = vmatmul.f32.gmra.mxu0 %v50
    %v222 = vpop.f32.mrf.mxu0
    %v223 = vadd.f32 %v116, %v222
    %224 = vmatmul.f32.gmra.mxu0 %v51
    %v225 = vpop.f32.mrf.mxu0
    %v226 = vadd.f32 %v116, %v225
    %227 = vmatmul.f32.gmra.mxu0 %v52
    %v228 = vpop.f32.mrf.mxu0
    %v229 = vadd.f32 %v116, %v228
    %230 = vmatmul.f32.gmra.mxu0 %v53
    %v231 = vpop.f32.mrf.mxu0
    %v232 = vadd.f32 %v116, %v231
    %233 = vmatmul.f32.gmra.mxu0 %v54
    %v234 = vpop.f32.mrf.mxu0
    %v235 = vadd.f32 %v116, %v234
    %236 = vmatmul.f32.gmra.mxu0 %v55
    %v237 = vpop.f32.mrf.mxu0
    %v238 = vadd.f32 %v116, %v237
    %239 = vdwg.mxu0
    %v240 = vld [vmem:[%s0] sm:$0xff]
    %v241 = vld [vmem:[%s0 + $0x8] sm:$0xff]
    %v242 = vld [vmem:[%s0 + $0x10] sm:$0xff]
    %v243 = vld [vmem:[%s0 + $0x18] sm:$0xff]
    %v244 = vld [vmem:[%s0 + $0x20] sm:$0xff]
    %v245 = vld [vmem:[%s0 + $0x28] sm:$0xff]
    %v246 = vld [vmem:[%s0 + $0x30] sm:$0xff]
    %v247 = vld [vmem:[%s0 + $0x38] sm:$0xff]
    %v248 = vstv %s104
    %v249 = vsub.s32 %v240, %v248
    %v250 = vsub.s32 %v241, %v248
    %v251 = vsub.s32 %v242, %v248
    %v252 = vsub.s32 %v243, %v248
    %v253 = vsub.s32 %v244, %v248
    %v254 = vsub.s32 %v245, %v248
    %v255 = vsub.s32 %v246, %v248
    %v256 = vsub.s32 %v247, %v248
    %s257 = smul.u32 0, 64
    %s258 = scalar_lea.vmem [#allocation2], %s257
    %v259 = vld [vmem:[%s258] sm:$0xff]
    %v260 = vld [vmem:[%s258 + $0x8] sm:$0xff]
    %v261 = vld [vmem:[%s258 + $0x10] sm:$0xff]
    %v262 = vld [vmem:[%s258 + $0x18] sm:$0xff]
    %v263 = vld [vmem:[%s258 + $0x20] sm:$0xff]
    %v264 = vld [vmem:[%s258 + $0x28] sm:$0xff]
    %v265 = vld [vmem:[%s258 + $0x30] sm:$0xff]
    %v266 = vld [vmem:[%s258 + $0x38] sm:$0xff]
    %267 = vset.pattern.permute.xlu0 0
    %268 = vperm.xlu0 %267, %v249
    %v269 = vpop.permute.xlu0 %268
    %270 = vset.pattern.permute.xlu0 0
    %271 = vperm.xlu0 %270, %v250
    %v272 = vpop.permute.xlu0 %271
    %273 = vset.pattern.permute.xlu0 0
    %274 = vperm.xlu0 %273, %v251
    %v275 = vpop.permute.xlu0 %274
    %276 = vset.pattern.permute.xlu0 0
    %277 = vperm.xlu0 %276, %v252
    %v278 = vpop.permute.xlu0 %277
    %279 = vset.pattern.permute.xlu0 0
    %280 = vperm.xlu0 %279, %v253
    %v281 = vpop.permute.xlu0 %280
    %282 = vset.pattern.permute.xlu0 0
    %283 = vperm.xlu0 %282, %v254
    %v284 = vpop.permute.xlu0 %283
    %285 = vset.pattern.permute.xlu0 0
    %286 = vperm.xlu0 %285, %v255
    %v287 = vpop.permute.xlu0 %286
    %288 = vset.pattern.permute.xlu0 0
    %289 = vperm.xlu0 %288, %v256
    %v290 = vpop.permute.xlu0 %289
    %vm291 = vcmp.eq.s32.totalorder %v107, %v269
    %vm292 = vcmp.eq.s32.totalorder %v108, %v269
    %vm293 = vcmp.eq.s32.totalorder %v109, %v269
    %vm294 = vcmp.eq.s32.totalorder %v107, %v272
    %vm295 = vcmp.eq.s32.totalorder %v108, %v272
    %vm296 = vcmp.eq.s32.totalorder %v109, %v272
    %vm297 = vcmp.eq.s32.totalorder %v107, %v275
    %vm298 = vcmp.eq.s32.totalorder %v108, %v275
    %vm299 = vcmp.eq.s32.totalorder %v109, %v275
    %vm300 = vcmp.eq.s32.totalorder %v107, %v278
    %vm301 = vcmp.eq.s32.totalorder %v108, %v278
    %vm302 = vcmp.eq.s32.totalorder %v109, %v278
    %vm303 = vcmp.eq.s32.totalorder %v107, %v281
    %vm304 = vcmp.eq.s32.totalorder %v108, %v281
    %vm305 = vcmp.eq.s32.totalorder %v109, %v281
    %vm306 = vcmp.eq.s32.totalorder %v107, %v284
    %vm307 = vcmp.eq.s32.totalorder %v108, %v284
    %vm308 = vcmp.eq.s32.totalorder %v109, %v284
    %vm309 = vcmp.eq.s32.totalorder %v107, %v287
    %vm310 = vcmp.eq.s32.totalorder %v108, %v287
    %vm311 = vcmp.eq.s32.totalorder %v109, %v287
    %vm312 = vcmp.eq.s32.totalorder %v107, %v290
    %vm313 = vcmp.eq.s32.totalorder %v108, %v290
    %vm314 = vcmp.eq.s32.totalorder %v109, %v290
    %v315 = vsel %vm291, %v135, 0.0
    %v316 = vsel %vm292, %v176, 0.0
    %v317 = vsel %vm293, %v217, 0.0
    %v318 = vsel %vm294, %v138, 0.0
    %v319 = vsel %vm295, %v179, 0.0
    %v320 = vsel %vm296, %v220, 0.0
    %v321 = vsel %vm297, %v141, 0.0
    %v322 = vsel %vm298, %v182, 0.0
    %v323 = vsel %vm299, %v223, 0.0
    %v324 = vsel %vm300, %v144, 0.0
    %v325 = vsel %vm301, %v185, 0.0
    %v326 = vsel %vm302, %v226, 0.0
    %v327 = vsel %vm303, %v147, 0.0
    %v328 = vsel %vm304, %v188, 0.0
    %v329 = vsel %vm305, %v229, 0.0
    %v330 = vsel %vm306, %v150, 0.0
    %v331 = vsel %vm307, %v191, 0.0
    %v332 = vsel %vm308, %v232, 0.0
    %v333 = vsel %vm309, %v153, 0.0
    %v334 = vsel %vm310, %v194, 0.0
    %v335 = vsel %vm311, %v235, 0.0
    %v336 = vsel %vm312, %v156, 0.0
    %v337 = vsel %vm313, %v197, 0.0
    %v338 = vsel %vm314, %v238, 0.0
    %v339 = vadd.f32 %v315, %v316
    %v340 = vadd.f32 %v339, %v317
    %341 = vadd.xlane.f32.xlu0 %v340
    %v342 = vpop.xlane.xlu0 %341
    %v343 = vadd.f32 %v318, %v319
    %v344 = vadd.f32 %v343, %v320
    %345 = vadd.xlane.f32.xlu0 %v344
    %v346 = vpop.xlane.xlu0 %345
    %v347 = vadd.f32 %v321, %v322
    %v348 = vadd.f32 %v347, %v323
    %349 = vadd.xlane.f32.xlu0 %v348
    %v350 = vpop.xlane.xlu0 %349
    %v351 = vadd.f32 %v324, %v325
    %v352 = vadd.f32 %v351, %v326
    %353 = vadd.xlane.f32.xlu0 %v352
    %v354 = vpop.xlane.xlu0 %353
    %v355 = vadd.f32 %v327, %v328
    %v356 = vadd.f32 %v355, %v329
    %357 = vadd.xlane.f32.xlu0 %v356
    %v358 = vpop.xlane.xlu0 %357
    %v359 = vadd.f32 %v330, %v331
    %v360 = vadd.f32 %v359, %v332
    %361 = vadd.xlane.f32.xlu0 %v360
    %v362 = vpop.xlane.xlu0 %361
    %v363 = vadd.f32 %v333, %v334
    %v364 = vadd.f32 %v363, %v335
    %365 = vadd.xlane.f32.xlu0 %v364
    %v366 = vpop.xlane.xlu0 %365
    %v367 = vadd.f32 %v336, %v337
    %v368 = vadd.f32 %v367, %v338
    %369 = vadd.xlane.f32.xlu0 %v368
    %v370 = vpop.xlane.xlu0 %369
    %v371 = vadd.f32 %v259, %v342
    %v372 = vadd.f32 %v260, %v346
    %v373 = vadd.f32 %v261, %v350
    %v374 = vadd.f32 %v262, %v354
    %v375 = vadd.f32 %v263, %v358
    %v376 = vadd.f32 %v264, %v362
    %v377 = vadd.f32 %v265, %v366
    %v378 = vadd.f32 %v266, %v370
    %v379 = vmax.f32 %v135, %v176
    %v380 = vmax.f32 %v379, %v217
    %381 = vmax.xlane.f32.xlu0 %v380
    %v382 = vpop.xlane.xlu0 %381
    %v383 = vmax.f32 %v138, %v179
    %v384 = vmax.f32 %v383, %v220
    %385 = vmax.xlane.f32.xlu0 %v384
    %v386 = vpop.xlane.xlu0 %385
    %v387 = vmax.f32 %v141, %v182
    %v388 = vmax.f32 %v387, %v223
    %389 = vmax.xlane.f32.xlu0 %v388
    %v390 = vpop.xlane.xlu0 %389
    %v391 = vmax.f32 %v144, %v185
    %v392 = vmax.f32 %v391, %v226
    %393 = vmax.xlane.f32.xlu0 %v392
    %v394 = vpop.xlane.xlu0 %393
    %v395 = vmax.f32 %v147, %v188
    %v396 = vmax.f32 %v395, %v229
    %397 = vmax.xlane.f32.xlu0 %v396
    %v398 = vpop.xlane.xlu0 %397
    %v399 = vmax.f32 %v150, %v191
    %v400 = vmax.f32 %v399, %v232
    %401 = vmax.xlane.f32.xlu0 %v400
    %v402 = vpop.xlane.xlu0 %401
    %v403 = vmax.f32 %v153, %v194
    %v404 = vmax.f32 %v403, %v235
    %405 = vmax.xlane.f32.xlu0 %v404
    %v406 = vpop.xlane.xlu0 %405
    %v407 = vmax.f32 %v156, %v197
    %v408 = vmax.f32 %v407, %v238
    %409 = vmax.xlane.f32.xlu0 %v408
    %v410 = vpop.xlane.xlu0 %409
    %v411 = vmax.f32 %v259, %v382
    %v412 = vmax.f32 %v260, %v386
    %v413 = vmax.f32 %v261, %v390
    %v414 = vmax.f32 %v262, %v394
    %v415 = vmax.f32 %v263, %v398
    %v416 = vmax.f32 %v264, %v402
    %v417 = vmax.f32 %v265, %v406
    %v418 = vmax.f32 %v266, %v410
    %v419 = vsub.f32 %v259, %v411
    %v420 = vsub.f32 %v260, %v412
    %v421 = vsub.f32 %v261, %v413
    %v422 = vsub.f32 %v262, %v414
    %v423 = vsub.f32 %v263, %v415
    %v424 = vsub.f32 %v264, %v416
    %v425 = vsub.f32 %v265, %v417
    %v426 = vsub.f32 %v266, %v418
    %v427 = vmul.f32 %v419, 1.442695
    %v428 = vpow.pop %v427
    %v429 = vmul.f32 %v420, 1.442695
    %v430 = vpow.pop %v429
    %v431 = vmul.f32 %v421, 1.442695
    %v432 = vpow.pop %v431
    %v433 = vmul.f32 %v422, 1.442695
    %v434 = vpow.pop %v433
    %v435 = vmul.f32 %v423, 1.442695
    %v436 = vpow.pop %v435
    %v437 = vmul.f32 %v424, 1.442695
    %v438 = vpow.pop %v437
    %v439 = vmul.f32 %v425, 1.442695
    %v440 = vpow.pop %v439
    %v441 = vmul.f32 %v426, 1.442695
    %v442 = vpow.pop %v441
    %451 = vrot.lane.b32.xlu0 %v259, 127
    %v452 = vpop.permute.xlu0 %451
    %453 = vrot.lane.b32.xlu0 %v260, 127
    %v454 = vpop.permute.xlu0 %453
    %455 = vrot.lane.b32.xlu0 %v261, 127
    %v456 = vpop.permute.xlu0 %455
    %457 = vrot.lane.b32.xlu0 %v262, 127
    %v458 = vpop.permute.xlu0 %457
    %459 = vrot.lane.b32.xlu0 %v263, 127
    %v460 = vpop.permute.xlu0 %459
    %461 = vrot.lane.b32.xlu0 %v264, 127
    %v462 = vpop.permute.xlu0 %461
    %463 = vrot.lane.b32.xlu0 %v265, 127
    %v464 = vpop.permute.xlu0 %463
    %465 = vrot.lane.b32.xlu0 %v266, 127
    %v466 = vpop.permute.xlu0 %465
    %v475 = vmul.f32 %v428, %v452
    %v476 = vmul.f32 %v430, %v454
    %v477 = vmul.f32 %v432, %v456
    %v478 = vmul.f32 %v434, %v458
    %v479 = vmul.f32 %v436, %v460
    %v480 = vmul.f32 %v438, %v462
    %v481 = vmul.f32 %v440, %v464
    %v482 = vmul.f32 %v442, %v466
    %484 = vset.pattern.permute.xlu0 0
    %485 = vperm.xlu0 %484, %v411
    %v486 = vpop.permute.xlu0 %485
    %489 = vset.pattern.permute.xlu0 0
    %490 = vperm.xlu0 %489, %v412
    %v491 = vpop.permute.xlu0 %490
    %494 = vset.pattern.permute.xlu0 0
    %495 = vperm.xlu0 %494, %v413
    %v496 = vpop.permute.xlu0 %495
    %499 = vset.pattern.permute.xlu0 0
    %500 = vperm.xlu0 %499, %v414
    %v501 = vpop.permute.xlu0 %500
    %504 = vset.pattern.permute.xlu0 0
    %505 = vperm.xlu0 %504, %v415
    %v506 = vpop.permute.xlu0 %505
    %509 = vset.pattern.permute.xlu0 0
    %510 = vperm.xlu0 %509, %v416
    %v511 = vpop.permute.xlu0 %510
    %514 = vset.pattern.permute.xlu0 0
    %515 = vperm.xlu0 %514, %v417
    %v516 = vpop.permute.xlu0 %515
    %519 = vset.pattern.permute.xlu0 0
    %520 = vperm.xlu0 %519, %v418
    %v521 = vpop.permute.xlu0 %520
    %v523 = vsub.f32 %v135, %v486
    %v524 = vsub.f32 %v176, %v486
    %v525 = vsub.f32 %v217, %v486
    %v526 = vsub.f32 %v138, %v491
    %v527 = vsub.f32 %v179, %v491
    %v528 = vsub.f32 %v220, %v491
    %v529 = vsub.f32 %v141, %v496
    %v530 = vsub.f32 %v182, %v496
    %v531 = vsub.f32 %v223, %v496
    %v532 = vsub.f32 %v144, %v501
    %v533 = vsub.f32 %v185, %v501
    %v534 = vsub.f32 %v226, %v501
    %v535 = vsub.f32 %v147, %v506
    %v536 = vsub.f32 %v188, %v506
    %v537 = vsub.f32 %v229, %v506
    %v538 = vsub.f32 %v150, %v511
    %v539 = vsub.f32 %v191, %v511
    %v540 = vsub.f32 %v232, %v511
    %v541 = vsub.f32 %v153, %v516
    %v542 = vsub.f32 %v194, %v516
    %v543 = vsub.f32 %v235, %v516
    %v544 = vsub.f32 %v156, %v521
    %v545 = vsub.f32 %v197, %v521
    %v546 = vsub.f32 %v238, %v521
    %v547 = vmul.f32 %v523, 1.442695
    %v548 = vpow.pop %v547
    %v549 = vmul.f32 %v524, 1.442695
    %v550 = vpow.pop %v549
    %v551 = vmul.f32 %v525, 1.442695
    %v552 = vpow.pop %v551
    %v553 = vmul.f32 %v526, 1.442695
    %v554 = vpow.pop %v553
    %v555 = vmul.f32 %v527, 1.442695
    %v556 = vpow.pop %v555
    %v557 = vmul.f32 %v528, 1.442695
    %v558 = vpow.pop %v557
    %v559 = vmul.f32 %v529, 1.442695
    %v560 = vpow.pop %v559
    %v561 = vmul.f32 %v530, 1.442695
    %v562 = vpow.pop %v561
    %v563 = vmul.f32 %v531, 1.442695
    %v564 = vpow.pop %v563
    %v565 = vmul.f32 %v532, 1.442695
    %v566 = vpow.pop %v565
    %v567 = vmul.f32 %v533, 1.442695
    %v568 = vpow.pop %v567
    %v569 = vmul.f32 %v534, 1.442695
    %v570 = vpow.pop %v569
    %v571 = vmul.f32 %v535, 1.442695
    %v572 = vpow.pop %v571
    %v573 = vmul.f32 %v536, 1.442695
    %v574 = vpow.pop %v573
    %v575 = vmul.f32 %v537, 1.442695
    %v576 = vpow.pop %v575
    %v577 = vmul.f32 %v538, 1.442695
    %v578 = vpow.pop %v577
    %v579 = vmul.f32 %v539, 1.442695
    %v580 = vpow.pop %v579
    %v581 = vmul.f32 %v540, 1.442695
    %v582 = vpow.pop %v581
    %v583 = vmul.f32 %v541, 1.442695
    %v584 = vpow.pop %v583
    %v585 = vmul.f32 %v542, 1.442695
    %v586 = vpow.pop %v585
    %v587 = vmul.f32 %v543, 1.442695
    %v588 = vpow.pop %v587
    %v589 = vmul.f32 %v544, 1.442695
    %v590 = vpow.pop %v589
    %v591 = vmul.f32 %v545, 1.442695
    %v592 = vpow.pop %v591
    %v593 = vmul.f32 %v546, 1.442695
    %v594 = vpow.pop %v593
    %v595 = vadd.f32 %v548, %v550
    %v596 = vadd.f32 %v595, %v552
    %597 = vadd.xlane.f32.xlu0 %v596
    %v598 = vpop.xlane.xlu0 %597
    %v599 = vadd.f32 %v554, %v556
    %v600 = vadd.f32 %v599, %v558
    %601 = vadd.xlane.f32.xlu0 %v600
    %v602 = vpop.xlane.xlu0 %601
    %v603 = vadd.f32 %v560, %v562
    %v604 = vadd.f32 %v603, %v564
    %605 = vadd.xlane.f32.xlu0 %v604
    %v606 = vpop.xlane.xlu0 %605
    %v607 = vadd.f32 %v566, %v568
    %v608 = vadd.f32 %v607, %v570
    %609 = vadd.xlane.f32.xlu0 %v608
    %v610 = vpop.xlane.xlu0 %609
    %v611 = vadd.f32 %v572, %v574
    %v612 = vadd.f32 %v611, %v576
    %613 = vadd.xlane.f32.xlu0 %v612
    %v614 = vpop.xlane.xlu0 %613
    %v615 = vadd.f32 %v578, %v580
    %v616 = vadd.f32 %v615, %v582
    %617 = vadd.xlane.f32.xlu0 %v616
    %v618 = vpop.xlane.xlu0 %617
    %v619 = vadd.f32 %v584, %v586
    %v620 = vadd.f32 %v619, %v588
    %621 = vadd.xlane.f32.xlu0 %v620
    %v622 = vpop.xlane.xlu0 %621
    %v623 = vadd.f32 %v590, %v592
    %v624 = vadd.f32 %v623, %v594
    %625 = vadd.xlane.f32.xlu0 %v624
    %v626 = vpop.xlane.xlu0 %625
    %v627 = vadd.f32 %v475, %v598
    %v628 = vadd.f32 %v476, %v602
    %v629 = vadd.f32 %v477, %v606
    %v630 = vadd.f32 %v478, %v610
    %v631 = vadd.f32 %v479, %v614
    %v632 = vadd.f32 %v480, %v618
    %v633 = vadd.f32 %v481, %v622
    %v634 = vadd.f32 %v482, %v626
    %vm635 = vcmask 7168
    %636 = vst.msk [vmem:[%s258] sm:$0xff] %vm635, %v411
    %637 = vst.msk [vmem:[%s258 + $0x8] sm:$0xff] %vm635, %v412
    %638 = vst.msk [vmem:[%s258 + $0x10] sm:$0xff] %vm635, %v413
    %639 = vst.msk [vmem:[%s258 + $0x18] sm:$0xff] %vm635, %v414
    %640 = vst.msk [vmem:[%s258 + $0x20] sm:$0xff] %vm635, %v415
    %641 = vst.msk [vmem:[%s258 + $0x28] sm:$0xff] %vm635, %v416
    %642 = vst.msk [vmem:[%s258 + $0x30] sm:$0xff] %vm635, %v417
    %643 = vst.msk [vmem:[%s258 + $0x38] sm:$0xff] %vm635, %v418
    %652 = vrot.lane.b32.xlu0 %v627, 1
    %v653 = vpop.permute.xlu0 %652
    %654 = vrot.lane.b32.xlu0 %v628, 1
    %v655 = vpop.permute.xlu0 %654
    %656 = vrot.lane.b32.xlu0 %v629, 1
    %v657 = vpop.permute.xlu0 %656
    %658 = vrot.lane.b32.xlu0 %v630, 1
    %v659 = vpop.permute.xlu0 %658
    %660 = vrot.lane.b32.xlu0 %v631, 1
    %v661 = vpop.permute.xlu0 %660
    %662 = vrot.lane.b32.xlu0 %v632, 1
    %v663 = vpop.permute.xlu0 %662
    %664 = vrot.lane.b32.xlu0 %v633, 1
    %v665 = vpop.permute.xlu0 %664
    %666 = vrot.lane.b32.xlu0 %v634, 1
    %v667 = vpop.permute.xlu0 %666
    %vm676 = vcmask 15368
    %677 = vst.msk [vmem:[%s258] sm:$0xff] %vm676, %v653
    %678 = vst.msk [vmem:[%s258 + $0x8] sm:$0xff] %vm676, %v655
    %679 = vst.msk [vmem:[%s258 + $0x10] sm:$0xff] %vm676, %v657
    %680 = vst.msk [vmem:[%s258 + $0x18] sm:$0xff] %vm676, %v659
    %681 = vst.msk [vmem:[%s258 + $0x20] sm:$0xff] %vm676, %v661
    %682 = vst.msk [vmem:[%s258 + $0x28] sm:$0xff] %vm676, %v663
    %683 = vst.msk [vmem:[%s258 + $0x30] sm:$0xff] %vm676, %v665
    %684 = vst.msk [vmem:[%s258 + $0x38] sm:$0xff] %vm676, %v667
    %vm685 = vcmask 23568
    %686 = vst.msk [vmem:[%s258] sm:$0xff] %vm685, %v371
    %687 = vst.msk [vmem:[%s258 + $0x8] sm:$0xff] %vm685, %v372
    %688 = vst.msk [vmem:[%s258 + $0x10] sm:$0xff] %vm685, %v373
    %689 = vst.msk [vmem:[%s258 + $0x18] sm:$0xff] %vm685, %v374
    %690 = vst.msk [vmem:[%s258 + $0x20] sm:$0xff] %vm685, %v375
    %691 = vst.msk [vmem:[%s258 + $0x28] sm:$0xff] %vm685, %v376
    %692 = vst.msk [vmem:[%s258 + $0x30] sm:$0xff] %vm685, %v377
    %693 = vst.msk [vmem:[%s258 + $0x38] sm:$0xff] %vm685, %v378
    // Predicated region
    $region22: #{tpu_custom_call.1} parent=1 // pred_check
      %p694 = pneg %p30
    $region23: #{tpu_custom_call.1} parent=1 // pred_check_branch
      %696 = sbr.rel (%p694) target = $region25
    $region24: #{tpu_custom_call.1} parent=1 // pred_region
      %vm697 = vcmp.ne.s32.totalorder %v240, 4294967196
      %vm698 = vcmp.ne.s32.totalorder %v241, 4294967196
      %vm699 = vcmp.ne.s32.totalorder %v242, 4294967196
      %vm700 = vcmp.ne.s32.totalorder %v243, 4294967196
      %vm701 = vcmp.ne.s32.totalorder %v244, 4294967196
      %vm702 = vcmp.ne.s32.totalorder %v245, 4294967196
      %vm703 = vcmp.ne.s32.totalorder %v246, 4294967196
      %vm704 = vcmp.ne.s32.totalorder %v247, 4294967196
      %v705 = vsel %vm697, 1, 0
      %v706 = vsel %vm698, 1, 0
      %v707 = vsel %vm699, 1, 0
      %v708 = vsel %vm700, 1, 0
      %v709 = vsel %vm701, 1, 0
      %v710 = vsel %vm702, 1, 0
      %v711 = vsel %vm703, 1, 0
      %v712 = vsel %vm704, 1, 0
      %v713 = vcvt.s32.f32 %v705
      %v714 = vcvt.s32.f32 %v706
      %v715 = vcvt.s32.f32 %v707
      %v716 = vcvt.s32.f32 %v708
      %v717 = vcvt.s32.f32 %v709
      %v718 = vcvt.s32.f32 %v710
      %v719 = vcvt.s32.f32 %v711
      %v720 = vcvt.s32.f32 %v712
      %v721 = vlog2.pop %v627
      %v722 = vmul.f32 %v721, 0.6931472
      %v723 = vlog2.pop %v628
      %v724 = vmul.f32 %v723, 0.6931472
      %v725 = vlog2.pop %v629
      %v726 = vmul.f32 %v725, 0.6931472
      %v727 = vlog2.pop %v630
      %v728 = vmul.f32 %v727, 0.6931472
      %v729 = vlog2.pop %v631
      %v730 = vmul.f32 %v729, 0.6931472
      %v731 = vlog2.pop %v632
      %v732 = vmul.f32 %v731, 0.6931472
      %v733 = vlog2.pop %v633
      %v734 = vmul.f32 %v733, 0.6931472
      %v735 = vlog2.pop %v634
      %v736 = vmul.f32 %v735, 0.6931472
      %v737 = vadd.f32 %v411, %v722
      %v738 = vadd.f32 %v412, %v724
      %v739 = vadd.f32 %v413, %v726
      %v740 = vadd.f32 %v414, %v728
      %v741 = vadd.f32 %v415, %v730
      %v742 = vadd.f32 %v416, %v732
      %v743 = vadd.f32 %v417, %v734
      %v744 = vadd.f32 %v418, %v736
      %753 = vrot.lane.b32.xlu0 %v371, 126
      %v754 = vpop.permute.xlu0 %753
      %755 = vrot.lane.b32.xlu0 %v372, 126
      %v756 = vpop.permute.xlu0 %755
      %757 = vrot.lane.b32.xlu0 %v373, 126
      %v758 = vpop.permute.xlu0 %757
      %759 = vrot.lane.b32.xlu0 %v374, 126
      %v760 = vpop.permute.xlu0 %759
      %761 = vrot.lane.b32.xlu0 %v375, 126
      %v762 = vpop.permute.xlu0 %761
      %763 = vrot.lane.b32.xlu0 %v376, 126
      %v764 = vpop.permute.xlu0 %763
      %765 = vrot.lane.b32.xlu0 %v377, 126
      %v766 = vpop.permute.xlu0 %765
      %767 = vrot.lane.b32.xlu0 %v378, 126
      %v768 = vpop.permute.xlu0 %767
      %v777 = vsub.f32 %v737, %v754
      %v778 = vsub.f32 %v738, %v756
      %v779 = vsub.f32 %v739, %v758
      %v780 = vsub.f32 %v740, %v760
      %v781 = vsub.f32 %v741, %v762
      %v782 = vsub.f32 %v742, %v764
      %v783 = vsub.f32 %v743, %v766
      %v784 = vsub.f32 %v744, %v768
      %v785 = vmul.f32 %v777, %v713
      %v786 = vmul.f32 %v778, %v714
      %v787 = vmul.f32 %v779, %v715
      %v788 = vmul.f32 %v780, %v716
      %v789 = vmul.f32 %v781, %v717
      %v790 = vmul.f32 %v782, %v718
      %v791 = vmul.f32 %v783, %v719
      %v792 = vmul.f32 %v784, %v720
      %793 = vst.msk [vmem:[%s3] sm:$0xff] %vm635, %v785
      %794 = vst.msk [vmem:[%s3 + $0x8] sm:$0xff] %vm635, %v786
      %795 = vst.msk [vmem:[%s3 + $0x10] sm:$0xff] %vm635, %v787
      %796 = vst.msk [vmem:[%s3 + $0x18] sm:$0xff] %vm635, %v788
      %797 = vst.msk [vmem:[%s3 + $0x20] sm:$0xff] %vm635, %v789
      %798 = vst.msk [vmem:[%s3 + $0x28] sm:$0xff] %vm635, %v790
      %799 = vst.msk [vmem:[%s3 + $0x30] sm:$0xff] %vm635, %v791
      %800 = vst.msk [vmem:[%s3 + $0x38] sm:$0xff] %vm635, %v792
    $region25: #{tpu_custom_call.1} parent=1 // pred_fallthru
      _
    // Predicated region
    $region26: #{tpu_custom_call.1} parent=1 // pred_check
      _
    $region27: #{tpu_custom_call.1} parent=1 // pred_check_branch
      %802 = sbr.rel (0) target = $region29
    $region28: #{tpu_custom_call.1} parent=1 // pred_region
      _
    $region29: #{tpu_custom_call.1} parent=1 // pred_fallthru
      _
    // Predicated region
    $region30: #{tpu_custom_call.1} parent=1 // pred_check
      _
    $region31: #{tpu_custom_call.1} parent=1 // pred_check_branch
      %804 = sbr.rel (0) target = $region33
    $region32: #{tpu_custom_call.1} parent=1 // pred_region
      _
    $region33: #{tpu_custom_call.1} parent=1 // pred_fallthru
      _
    %805 = vsyncpa [#allocation4], 1

// kernel: tpu_custom_call.1
$region0: #{tpu_custom_call.1}
  #allocation0 [shape = 'u32[]', space=smem, size = 0x4, offset = 0x4, fixed_abs, tag = 'smem constant byte address 0x4 - core index']
  #allocation1 [shape = 'u32[72,128]{1,0:T(1,128)}', space=vmem, size = 0x9000, scoped, tag = 'internal scratch']
  #allocation2 [shape = 'f32[1,64,128]{2,1,0:T(8,128)}', space=vmem, size = 0x8000, scoped, tag = 'scratch operand']
  %s0 = inlined_call_operand.vmem [shape: s32[64,1], index: 0, kind: input, shape index: {}]
  %s1 = inlined_call_operand.vmem [shape: f32[64,128], index: 1, kind: input, shape index: {}]
  %s2 = inlined_call_operand.hbm [shape: f32[128,384], index: 2, kind: input, shape index: {}]
  %s3 = inlined_call_operand.vmem [shape: f32[64,1], index: 3, kind: output, shape index: {}]
  %s4 = sld [smem:[#allocation0]]
  $region34: #{tpu_custom_call.1} parent=0
    _
  %s6 = ssub.s32 1, %s4
  %s7 = scalar_select 0, %s6, %s4
  $region1: #{tpu_custom_call.1} parent=0
    #allocation3 [shape = 'u8[196608]{0}', space=vmem, size = 0x30000, scoped, tag = 'input window, operand 2, single buffered']
    #allocation4 [shape = 's32[1]{0}', space=sflag, size = 0x4, scoped, tag = 'scoped memory for tpu_custom_call.1']
    %8 = vsyncpa [#allocation4], 0
    // Predicated region
    $region2: #{tpu_custom_call.1} parent=1 // pred_check
      _
    $region3: #{tpu_custom_call.1} parent=1 // pred_check_branch
      %10 = sbr.rel (0) target = $region5
    $region4: #{tpu_custom_call.1} parent=1 // pred_region
      _
    $region5: #{tpu_custom_call.1} parent=1 // pred_fallthru
      _
    // Predicated region
    $region6: #{tpu_custom_call.1} parent=1 // pred_check
      _
    $region7: #{tpu_custom_call.1} parent=1 // pred_check_branch
      %12 = sbr.rel (0) target = $region9
    $region8: #{tpu_custom_call.1} parent=1 // pred_region
      _
    $region9: #{tpu_custom_call.1} parent=1 // pred_fallthru
      _
    // Predicated region
    $region10: #{tpu_custom_call.1} parent=1 // pred_check
      _
    $region11: #{tpu_custom_call.1} parent=1 // pred_check_branch
      %14 = sbr.rel (0) target = $region13
    $region12: #{tpu_custom_call.1} parent=1 // pred_region
      %16 = vsyncadd [#allocation4], 0
      %s17 = sshll.u32 %s2, 4
      %s18 = int_to_ptr.hbm [resolvable:$true] %s17
      %s19 = sshll.u32 [#allocation3], 4
      %s20 = int_to_ptr.vmem [resolvable:$true] %s19
      %25 = dma.hbm_to_vmem [thread:$0]  %s18, 6144, %s20, [#allocation4], 384, 384, 24
    $region13: #{tpu_custom_call.1} parent=1 // pred_fallthru
      _
    // Predicated region
    $region14: #{tpu_custom_call.1} parent=1 // pred_check
      _
    $region15: #{tpu_custom_call.1} parent=1 // pred_check_branch
      %27 = sbr.rel (0) target = $region17
    $region16: #{tpu_custom_call.1} parent=1 // pred_region
      %29 = dma.done [#allocation4], 6144
    $region17: #{tpu_custom_call.1} parent=1 // pred_fallthru
      _
    %p30 = scmp.eq.s32.totalorder 0, 0
    // Predicated region
    $region18: #{tpu_custom_call.1} parent=1 // pred_check
      %p31 = pneg %p30
    $region19: #{tpu_custom_call.1} parent=1 // pred_check_branch
      %33 = sbr.rel (%p31) target = $region21
    $region20: #{tpu_custom_call.1} parent=1 // pred_region
      %v34 = vlaneseq
      %v35 = vand.u32 %v34, 127
      %vm36 = vcmp.eq.s32.totalorder %v35, 0
      %v37 = vsel %vm36, -1e+30, 0.0
      %s38 = smul.u32 0, 64
      %s39 = scalar_lea.vmem [#allocation2], %s38
      %40 = vst [vmem:[%s39] sm:$0xff] %v37
      %41 = vst [vmem:[%s39 + $0x8] sm:$0xff] %v37
      %42 = vst [vmem:[%s39 + $0x10] sm:$0xff] %v37
      %43 = vst [vmem:[%s39 + $0x18] sm:$0xff] %v37
      %44 = vst [vmem:[%s39 + $0x20] sm:$0xff] %v37
      %45 = vst [vmem:[%s39 + $0x28] sm:$0xff] %v37
      %46 = vst [vmem:[%s39 + $0x30] sm:$0xff] %v37
      %47 = vst [vmem:[%s39 + $0x38] sm:$0xff] %v37
    $region21: #{tpu_custom_call.1} parent=1 // pred_fallthru
      _
    %v48 = vld [vmem:[%s1] sm:$0xff]
    %v49 = vld [vmem:[%s1 + $0x8] sm:$0xff]
    %v50 = vld [vmem:[%s1 + $0x10] sm:$0xff]
    %v51 = vld [vmem:[%s1 + $0x18] sm:$0xff]
    %v52 = vld [vmem:[%s1 + $0x20] sm:$0xff]
    %v53 = vld [vmem:[%s1 + $0x28] sm:$0xff]
    %v54 = vld [vmem:[%s1 + $0x30] sm:$0xff]
    %v55 = vld [vmem:[%s1 + $0x38] sm:$0xff]
    %v56 = vld [vmem:[#allocation3] sm:$0xff]
    %v57 = vld [vmem:[#allocation3 + $0x8] sm:$0xff]
    %v58 = vld [vmem:[#allocation3 + $0x10] sm:$0xff]
    %v59 = vld [vmem:[#allocation3 + $0x18] sm:$0xff]
    %v60 = vld [vmem:[#allocation3 + $0x20] sm:$0xff]
    %v61 = vld [vmem:[#allocation3 + $0x28] sm:$0xff]
    %v62 = vld [vmem:[#allocation3 + $0x30] sm:$0xff]
    %v63 = vld [vmem:[#allocation3 + $0x38] sm:$0xff]
    %v64 = vld [vmem:[#allocation3 + $0x40] sm:$0xff]
    %v65 = vld [vmem:[#allocation3 + $0x48] sm:$0xff]
    %v66 = vld [vmem:[#allocation3 + $0x50] sm:$0xff]
    %v67 = vld [vmem:[#allocation3 + $0x58] sm:$0xff]
    %v68 = vld [vmem:[#allocation3 + $0x60] sm:$0xff]
    %v69 = vld [vmem:[#allocation3 + $0x68] sm:$0xff]
    %v70 = vld [vmem:[#allocation3 + $0x70] sm:$0xff]
    %v71 = vld [vmem:[#allocation3 + $0x78] sm:$0xff]
    %v72 = vld [vmem:[#allocation3 + $0x80] sm:$0xff]
    %v73 = vld [vmem:[#allocation3 + $0x88] sm:$0xff]
    %v74 = vld [vmem:[#allocation3 + $0x90] sm:$0xff]
    %v75 = vld [vmem:[#allocation3 + $0x98] sm:$0xff]
    %v76 = vld [vmem:[#allocation3 + $0xa0] sm:$0xff]
    %v77 = vld [vmem:[#allocation3 + $0xa8] sm:$0xff]
    %v78 = vld [vmem:[#allocation3 + $0xb0] sm:$0xff]
    %v79 = vld [vmem:[#allocation3 + $0xb8] sm:$0xff]
    %v80 = vld [vmem:[#allocation3 + $0xc0] sm:$0xff]
    %v81 = vld [vmem:[#allocation3 + $0xc8] sm:$0xff]
    %v82 = vld [vmem:[#allocation3 + $0xd0] sm:$0xff]
    %v83 = vld [vmem:[#allocation3 + $0xd8] sm:$0xff]
    %v84 = vld [vmem:[#allocation3 + $0xe0] sm:$0xff]
    %v85 = vld [vmem:[#allocation3 + $0xe8] sm:$0xff]
    %v86 = vld [vmem:[#allocation3 + $0xf0] sm:$0xff]
    %v87 = vld [vmem:[#allocation3 + $0xf8] sm:$0xff]
    %v88 = vld [vmem:[#allocation3 + $0x100] sm:$0xff]
    %v89 = vld [vmem:[#allocation3 + $0x108] sm:$0xff]
    %v90 = vld [vmem:[#allocation3 + $0x110] sm:$0xff]
    %v91 = vld [vmem:[#allocation3 + $0x118] sm:$0xff]
    %v92 = vld [vmem:[#allocation3 + $0x120] sm:$0xff]
    %v93 = vld [vmem:[#allocation3 + $0x128] sm:$0xff]
    %v94 = vld [vmem:[#allocation3 + $0x130] sm:$0xff]
    %v95 = vld [vmem:[#allocation3 + $0x138] sm:$0xff]
    %v96 = vld [vmem:[#allocation3 + $0x140] sm:$0xff]
    %v97 = vld [vmem:[#allocation3 + $0x148] sm:$0xff]
    %v98 = vld [vmem:[#allocation3 + $0x150] sm:$0xff]
    %v99 = vld [vmem:[#allocation3 + $0x158] sm:$0xff]
    %v100 = vld [vmem:[#allocation3 + $0x160] sm:$0xff]
    %v101 = vld [vmem:[#allocation3 + $0x168] sm:$0xff]
    %v102 = vld [vmem:[#allocation3 + $0x170] sm:$0xff]
    %v103 = vld [vmem:[#allocation3 + $0x178] sm:$0xff]
    %s104 = smul.u32 0, 384
    %s105 = ssub.s32 300, %s104
    %v106 = vlaneseq
    %v107 = vand.u32 %v106, 127
    %v108 = vadd.s32 %v107, 128
    %v109 = vadd.s32 %v107, 256
    %v110 = vstv %s105
    %vm111 = vcmp.lt.s32.totalorder %v107, %v110
    %vm112 = vcmp.lt.s32.totalorder %v108, %v110
    %vm113 = vcmp.lt.s32.totalorder %v109, %v110
    %v114 = vsel %vm111, 0.0, -1e+30
    %v115 = vsel %vm112, 0.0, -1e+30
    %v116 = vsel %vm113, 0.0, -1e+30
    %117 = vmatpush.msra.mxu0 %v101
    %118 = vmatpush.msra.mxu0 %v98
    %119 = vmatpush.msra.mxu0 %v95
    %120 = vmatpush.msra.mxu0 %v92
    %121 = vmatpush.msra.mxu0 %v89
    %122 = vmatpush.msra.mxu0 %v86
    %123 = vmatpush.msra.mxu0 %v83
    %124 = vmatpush.msra.mxu0 %v80
    %125 = vmatpush.msra.mxu0 %v77
    %126 = vmatpush.msra.mxu0 %v74
    %127 = vmatpush.msra.mxu0 %v71
    %128 = vmatpush.msra.mxu0 %v68
    %129 = vmatpush.msra.mxu0 %v65
    %130 = vmatpush.msra.mxu0 %v62
    %131 = vmatpush.msra.mxu0 %v59
    %132 = vmatpush.msra.mxu0 %v56
    %133 = vmatmul.f32.gmra.mxu0 %v48
    %v134 = vpop.f32.mrf.mxu0
    %v135 = vadd.f32 %v114, %v134
    %136 = vmatmul.f32.gmra.mxu0 %v49
    %v137 = vpop.f32.mrf.mxu0
    %v138 = vadd.f32 %v114, %v137
    %139 = vmatmul.f32.gmra.mxu0 %v50
    %v140 = vpop.f32.mrf.mxu0
    %v141 = vadd.f32 %v114, %v140
    %142 = vmatmul.f32.gmra.mxu0 %v51
    %v143 = vpop.f32.mrf.mxu0
    %v144 = vadd.f32 %v114, %v143
    %145 = vmatmul.f32.gmra.mxu0 %v52
    %v146 = vpop.f32.mrf.mxu0
    %v147 = vadd.f32 %v114, %v146
    %148 = vmatmul.f32.gmra.mxu0 %v53
    %v149 = vpop.f32.mrf.mxu0
    %v150 = vadd.f32 %v114, %v149
    %151 = vmatmul.f32.gmra.mxu0 %v54
    %v152 = vpop.f32.mrf.mxu0
    %v153 = vadd.f32 %v114, %v152
    %154 = vmatmul.f32.gmra.mxu0 %v55
    %v155 = vpop.f32.mrf.mxu0
    %v156 = vadd.f32 %v114, %v155
    %157 = vdwg.mxu0
    %158 = vmatpush.msra.mxu0 %v102
    %159 = vmatpush.msra.mxu0 %v99
    %160 = vmatpush.msra.mxu0 %v96
    %161 = vmatpush.msra.mxu0 %v93
    %162 = vmatpush.msra.mxu0 %v90
    %163 = vmatpush.msra.mxu0 %v87
    %164 = vmatpush.msra.mxu0 %v84
    %165 = vmatpush.msra.mxu0 %v81
    %166 = vmatpush.msra.mxu0 %v78
    %167 = vmatpush.msra.mxu0 %v75
    %168 = vmatpush.msra.mxu0 %v72
    %169 = vmatpush.msra.mxu0 %v69
    %170 = vmatpush.msra.mxu0 %v66
    %171 = vmatpush.msra.mxu0 %v63
    %172 = vmatpush.msra.mxu0 %v60
    %173 = vmatpush.msra.mxu0 %v57
    %174 = vmatmul.f32.gmra.mxu0 %v48
    %v175 = vpop.f32.mrf.mxu0
    %v176 = vadd.f32 %v115, %v175
    %177 = vmatmul.f32.gmra.mxu0 %v49
    %v178 = vpop.f32.mrf.mxu0
    %v179 = vadd.f32 %v115, %v178
    %180 = vmatmul.f32.gmra.mxu0 %v50
    %v181 = vpop.f32.mrf.mxu0
    %v182 = vadd.f32 %v115, %v181
    %183 = vmatmul.f32.gmra.mxu0 %v51
    %v184 = vpop.f32.mrf.mxu0
    %v185 = vadd.f32 %v115, %v184
    %186 = vmatmul.f32.gmra.mxu0 %v52
    %v187 = vpop.f32.mrf.mxu0
    %v188 = vadd.f32 %v115, %v187
    %189 = vmatmul.f32.gmra.mxu0 %v53
    %v190 = vpop.f32.mrf.mxu0
    %v191 = vadd.f32 %v115, %v190
    %192 = vmatmul.f32.gmra.mxu0 %v54
    %v193 = vpop.f32.mrf.mxu0
    %v194 = vadd.f32 %v115, %v193
    %195 = vmatmul.f32.gmra.mxu0 %v55
    %v196 = vpop.f32.mrf.mxu0
    %v197 = vadd.f32 %v115, %v196
    %198 = vdwg.mxu0
    %199 = vmatpush.msra.mxu0 %v103
    %200 = vmatpush.msra.mxu0 %v100
    %201 = vmatpush.msra.mxu0 %v97
    %202 = vmatpush.msra.mxu0 %v94
    %203 = vmatpush.msra.mxu0 %v91
    %204 = vmatpush.msra.mxu0 %v88
    %205 = vmatpush.msra.mxu0 %v85
    %206 = vmatpush.msra.mxu0 %v82
    %207 = vmatpush.msra.mxu0 %v79
    %208 = vmatpush.msra.mxu0 %v76
    %209 = vmatpush.msra.mxu0 %v73
    %210 = vmatpush.msra.mxu0 %v70
    %211 = vmatpush.msra.mxu0 %v67
    %212 = vmatpush.msra.mxu0 %v64
    %213 = vmatpush.msra.mxu0 %v61
    %214 = vmatpush.msra.mxu0 %v58
    %215 = vmatmul.f32.gmra.mxu0 %v48
    %v216 = vpop.f32.mrf.mxu0
    %v217 = vadd.f32 %v116, %v216
    %218 = vmatmul.f32.gmra.mxu0 %v49
    %v219 = vpop.f32.mrf.mxu0
    %v220 = vadd.f32 %v116, %v219
    %221 = vmatmul.f32.gmra.mxu0 %v50
    %v222 = vpop.f32.mrf.mxu0
    %v223 = vadd.f32 %v116, %v222
    %224 = vmatmul.f32.gmra.mxu0 %v51
    %v225 = vpop.f32.mrf.mxu0
    %v226 = vadd.f32 %v116, %v225
    %227 = vmatmul.f32.gmra.mxu0 %v52
    %v228 = vpop.f32.mrf.mxu0
    %v229 = vadd.f32 %v116, %v228
    %230 = vmatmul.f32.gmra.mxu0 %v53
    %v231 = vpop.f32.mrf.mxu0
    %v232 = vadd.f32 %v116, %v231
    %233 = vmatmul.f32.gmra.mxu0 %v54
    %v234 = vpop.f32.mrf.mxu0
    %v235 = vadd.f32 %v116, %v234
    %236 = vmatmul.f32.gmra.mxu0 %v55
    %v237 = vpop.f32.mrf.mxu0
    %v238 = vadd.f32 %v116, %v237
    %239 = vdwg.mxu0
    %v240 = vld [vmem:[%s0] sm:$0xff]
    %v241 = vld [vmem:[%s0 + $0x8] sm:$0xff]
    %v242 = vld [vmem:[%s0 + $0x10] sm:$0xff]
    %v243 = vld [vmem:[%s0 + $0x18] sm:$0xff]
    %v244 = vld [vmem:[%s0 + $0x20] sm:$0xff]
    %v245 = vld [vmem:[%s0 + $0x28] sm:$0xff]
    %v246 = vld [vmem:[%s0 + $0x30] sm:$0xff]
    %v247 = vld [vmem:[%s0 + $0x38] sm:$0xff]
    %v248 = vstv %s104
    %v249 = vsub.s32 %v240, %v248
    %v250 = vsub.s32 %v241, %v248
    %v251 = vsub.s32 %v242, %v248
    %v252 = vsub.s32 %v243, %v248
    %v253 = vsub.s32 %v244, %v248
    %v254 = vsub.s32 %v245, %v248
    %v255 = vsub.s32 %v246, %v248
    %v256 = vsub.s32 %v247, %v248
    %s257 = smul.u32 0, 64
    %s258 = scalar_lea.vmem [#allocation2], %s257
    %v259 = vld [vmem:[%s258] sm:$0xff]
    %v260 = vld [vmem:[%s258 + $0x8] sm:$0xff]
    %v261 = vld [vmem:[%s258 + $0x10] sm:$0xff]
    %v262 = vld [vmem:[%s258 + $0x18] sm:$0xff]
    %v263 = vld [vmem:[%s258 + $0x20] sm:$0xff]
    %v264 = vld [vmem:[%s258 + $0x28] sm:$0xff]
    %v265 = vld [vmem:[%s258 + $0x30] sm:$0xff]
    %v266 = vld [vmem:[%s258 + $0x38] sm:$0xff]
    %267 = vset.pattern.permute.xlu0 0
    %268 = vperm.xlu0 %267, %v249
    %v269 = vpop.permute.xlu0 %268
    %270 = vset.pattern.permute.xlu0 0
    %271 = vperm.xlu0 %270, %v250
    %v272 = vpop.permute.xlu0 %271
    %273 = vset.pattern.permute.xlu0 0
    %274 = vperm.xlu0 %273, %v251
    %v275 = vpop.permute.xlu0 %274
    %276 = vset.pattern.permute.xlu0 0
    %277 = vperm.xlu0 %276, %v252
    %v278 = vpop.permute.xlu0 %277
    %279 = vset.pattern.permute.xlu0 0
    %280 = vperm.xlu0 %279, %v253
    %v281 = vpop.permute.xlu0 %280
    %282 = vset.pattern.permute.xlu0 0
    %283 = vperm.xlu0 %282, %v254
    %v284 = vpop.permute.xlu0 %283
    %285 = vset.pattern.permute.xlu0 0
    %286 = vperm.xlu0 %285, %v255
    %v287 = vpop.permute.xlu0 %286
    %288 = vset.pattern.permute.xlu0 0
    %289 = vperm.xlu0 %288, %v256
    %v290 = vpop.permute.xlu0 %289
    %vm291 = vcmp.eq.s32.totalorder %v107, %v269
    %vm292 = vcmp.eq.s32.totalorder %v108, %v269
    %vm293 = vcmp.eq.s32.totalorder %v109, %v269
    %vm294 = vcmp.eq.s32.totalorder %v107, %v272
    %vm295 = vcmp.eq.s32.totalorder %v108, %v272
    %vm296 = vcmp.eq.s32.totalorder %v109, %v272
    %vm297 = vcmp.eq.s32.totalorder %v107, %v275
    %vm298 = vcmp.eq.s32.totalorder %v108, %v275
    %vm299 = vcmp.eq.s32.totalorder %v109, %v275
    %vm300 = vcmp.eq.s32.totalorder %v107, %v278
    %vm301 = vcmp.eq.s32.totalorder %v108, %v278
    %vm302 = vcmp.eq.s32.totalorder %v109, %v278
    %vm303 = vcmp.eq.s32.totalorder %v107, %v281
    %vm304 = vcmp.eq.s32.totalorder %v108, %v281
    %vm305 = vcmp.eq.s32.totalorder %v109, %v281
    %vm306 = vcmp.eq.s32.totalorder %v107, %v284
    %vm307 = vcmp.eq.s32.totalorder %v108, %v284
    %vm308 = vcmp.eq.s32.totalorder %v109, %v284
    %vm309 = vcmp.eq.s32.totalorder %v107, %v287
    %vm310 = vcmp.eq.s32.totalorder %v108, %v287
    %vm311 = vcmp.eq.s32.totalorder %v109, %v287
    %vm312 = vcmp.eq.s32.totalorder %v107, %v290
    %vm313 = vcmp.eq.s32.totalorder %v108, %v290
    %vm314 = vcmp.eq.s32.totalorder %v109, %v290
    %v315 = vsel %vm291, %v135, 0.0
    %v316 = vsel %vm292, %v176, 0.0
    %v317 = vsel %vm293, %v217, 0.0
    %v318 = vsel %vm294, %v138, 0.0
    %v319 = vsel %vm295, %v179, 0.0
    %v320 = vsel %vm296, %v220, 0.0
    %v321 = vsel %vm297, %v141, 0.0
    %v322 = vsel %vm298, %v182, 0.0
    %v323 = vsel %vm299, %v223, 0.0
    %v324 = vsel %vm300, %v144, 0.0
    %v325 = vsel %vm301, %v185, 0.0
    %v326 = vsel %vm302, %v226, 0.0
    %v327 = vsel %vm303, %v147, 0.0
    %v328 = vsel %vm304, %v188, 0.0
    %v329 = vsel %vm305, %v229, 0.0
    %v330 = vsel %vm306, %v150, 0.0
    %v331 = vsel %vm307, %v191, 0.0
    %v332 = vsel %vm308, %v232, 0.0
    %v333 = vsel %vm309, %v153, 0.0
    %v334 = vsel %vm310, %v194, 0.0
    %v335 = vsel %vm311, %v235, 0.0
    %v336 = vsel %vm312, %v156, 0.0
    %v337 = vsel %vm313, %v197, 0.0
    %v338 = vsel %vm314, %v238, 0.0
    %v339 = vadd.f32 %v315, %v316
    %v340 = vadd.f32 %v339, %v317
    %341 = vadd.xlane.f32.xlu0 %v340
    %v342 = vpop.xlane.xlu0 %341
    %v343 = vadd.f32 %v318, %v319
    %v344 = vadd.f32 %v343, %v320
    %345 = vadd.xlane.f32.xlu0 %v344
    %v346 = vpop.xlane.xlu0 %345
    %v347 = vadd.f32 %v321, %v322
    %v348 = vadd.f32 %v347, %v323
    %349 = vadd.xlane.f32.xlu0 %v348
    %v350 = vpop.xlane.xlu0 %349
    %v351 = vadd.f32 %v324, %v325
    %v352 = vadd.f32 %v351, %v326
    %353 = vadd.xlane.f32.xlu0 %v352
    %v354 = vpop.xlane.xlu0 %353
    %v355 = vadd.f32 %v327, %v328
    %v356 = vadd.f32 %v355, %v329
    %357 = vadd.xlane.f32.xlu0 %v356
    %v358 = vpop.xlane.xlu0 %357
    %v359 = vadd.f32 %v330, %v331
    %v360 = vadd.f32 %v359, %v332
    %361 = vadd.xlane.f32.xlu0 %v360
    %v362 = vpop.xlane.xlu0 %361
    %v363 = vadd.f32 %v333, %v334
    %v364 = vadd.f32 %v363, %v335
    %365 = vadd.xlane.f32.xlu0 %v364
    %v366 = vpop.xlane.xlu0 %365
    %v367 = vadd.f32 %v336, %v337
    %v368 = vadd.f32 %v367, %v338
    %369 = vadd.xlane.f32.xlu0 %v368
    %v370 = vpop.xlane.xlu0 %369
    %v371 = vadd.f32 %v259, %v342
    %v372 = vadd.f32 %v260, %v346
    %v373 = vadd.f32 %v261, %v350
    %v374 = vadd.f32 %v262, %v354
    %v375 = vadd.f32 %v263, %v358
    %v376 = vadd.f32 %v264, %v362
    %v377 = vadd.f32 %v265, %v366
    %v378 = vadd.f32 %v266, %v370
    %v379 = vmax.f32 %v135, %v176
    %v380 = vmax.f32 %v379, %v217
    %381 = vmax.xlane.f32.xlu0 %v380
    %v382 = vpop.xlane.xlu0 %381
    %v383 = vmax.f32 %v138, %v179
    %v384 = vmax.f32 %v383, %v220
    %385 = vmax.xlane.f32.xlu0 %v384
    %v386 = vpop.xlane.xlu0 %385
    %v387 = vmax.f32 %v141, %v182
    %v388 = vmax.f32 %v387, %v223
    %389 = vmax.xlane.f32.xlu0 %v388
    %v390 = vpop.xlane.xlu0 %389
    %v391 = vmax.f32 %v144, %v185
    %v392 = vmax.f32 %v391, %v226
    %393 = vmax.xlane.f32.xlu0 %v392
    %v394 = vpop.xlane.xlu0 %393
    %v395 = vmax.f32 %v147, %v188
    %v396 = vmax.f32 %v395, %v229
    %397 = vmax.xlane.f32.xlu0 %v396
    %v398 = vpop.xlane.xlu0 %397
    %v399 = vmax.f32 %v150, %v191
    %v400 = vmax.f32 %v399, %v232
    %401 = vmax.xlane.f32.xlu0 %v400
    %v402 = vpop.xlane.xlu0 %401
    %v403 = vmax.f32 %v153, %v194
    %v404 = vmax.f32 %v403, %v235
    %405 = vmax.xlane.f32.xlu0 %v404
    %v406 = vpop.xlane.xlu0 %405
    %v407 = vmax.f32 %v156, %v197
    %v408 = vmax.f32 %v407, %v238
    %409 = vmax.xlane.f32.xlu0 %v408
    %v410 = vpop.xlane.xlu0 %409
    %v411 = vmax.f32 %v259, %v382
    %v412 = vmax.f32 %v260, %v386
    %v413 = vmax.f32 %v261, %v390
    %v414 = vmax.f32 %v262, %v394
    %v415 = vmax.f32 %v263, %v398
    %v416 = vmax.f32 %v264, %v402
    %v417 = vmax.f32 %v265, %v406
    %v418 = vmax.f32 %v266, %v410
    %v419 = vsub.f32 %v259, %v411
    %v420 = vsub.f32 %v260, %v412
    %v421 = vsub.f32 %v261, %v413
    %v422 = vsub.f32 %v262, %v414
    %v423 = vsub.f32 %v263, %v415
    %v424 = vsub.f32 %v264, %v416
    %v425 = vsub.f32 %v265, %v417
    %v426 = vsub.f32 %v266, %v418
    %v427 = vmul.f32 %v419, 1.442695
    %v428 = vpow.pop %v427
    %v429 = vmul.f32 %v420, 1.442695
    %v430 = vpow.pop %v429
    %v431 = vmul.f32 %v421, 1.442695
    %v432 = vpow.pop %v431
    %v433 = vmul.f32 %v422, 1.442695
    %v434 = vpow.pop %v433
    %v435 = vmul.f32 %v423, 1.442695
    %v436 = vpow.pop %v435
    %v437 = vmul.f32 %v424, 1.442695
    %v438 = vpow.pop %v437
    %v439 = vmul.f32 %v425, 1.442695
    %v440 = vpow.pop %v439
    %v441 = vmul.f32 %v426, 1.442695
    %v442 = vpow.pop %v441
    %451 = vrot.lane.b32.xlu0 %v259, 127
    %v452 = vpop.permute.xlu0 %451
    %453 = vrot.lane.b32.xlu0 %v260, 127
    %v454 = vpop.permute.xlu0 %453
    %455 = vrot.lane.b32.xlu0 %v261, 127
    %v456 = vpop.permute.xlu0 %455
    %457 = vrot.lane.b32.xlu0 %v262, 127
    %v458 = vpop.permute.xlu0 %457
    %459 = vrot.lane.b32.xlu0 %v263, 127
    %v460 = vpop.permute.xlu0 %459
    %461 = vrot.lane.b32.xlu0 %v264, 127
    %v462 = vpop.permute.xlu0 %461
    %463 = vrot.lane.b32.xlu0 %v265, 127
    %v464 = vpop.permute.xlu0 %463
    %465 = vrot.lane.b32.xlu0 %v266, 127
    %v466 = vpop.permute.xlu0 %465
    %v475 = vmul.f32 %v428, %v452
    %v476 = vmul.f32 %v430, %v454
    %v477 = vmul.f32 %v432, %v456
    %v478 = vmul.f32 %v434, %v458
    %v479 = vmul.f32 %v436, %v460
    %v480 = vmul.f32 %v438, %v462
    %v481 = vmul.f32 %v440, %v464
    %v482 = vmul.f32 %v442, %v466
    %484 = vset.pattern.permute.xlu0 0
    %485 = vperm.xlu0 %484, %v411
    %v486 = vpop.permute.xlu0 %485
    %489 = vset.pattern.permute.xlu0 0
    %490 = vperm.xlu0 %489, %v412
    %v491 = vpop.permute.xlu0 %490
    %494 = vset.pattern.permute.xlu0 0
    %495 = vperm.xlu0 %494, %v413
    %v496 = vpop.permute.xlu0 %495
    %499 = vset.pattern.permute.xlu0 0
    %500 = vperm.xlu0 %499, %v414
    %v501 = vpop.permute.xlu0 %500
    %504 = vset.pattern.permute.xlu0 0
    %505 = vperm.xlu0 %504, %v415
    %v506 = vpop.permute.xlu0 %505
    %509 = vset.pattern.permute.xlu0 0
    %510 = vperm.xlu0 %509, %v416
    %v511 = vpop.permute.xlu0 %510
    %514 = vset.pattern.permute.xlu0 0
    %515 = vperm.xlu0 %514, %v417
    %v516 = vpop.permute.xlu0 %515
    %519 = vset.pattern.permute.xlu0 0
    %520 = vperm.xlu0 %519, %v418
    %v521 = vpop.permute.xlu0 %520
    %v523 = vsub.f32 %v135, %v486
    %v524 = vsub.f32 %v176, %v486
    %v525 = vsub.f32 %v217, %v486
    %v526 = vsub.f32 %v138, %v491
    %v527 = vsub.f32 %v179, %v491
    %v528 = vsub.f32 %v220, %v491
    %v529 = vsub.f32 %v141, %v496
    %v530 = vsub.f32 %v182, %v496
    %v531 = vsub.f32 %v223, %v496
    %v532 = vsub.f32 %v144, %v501
    %v533 = vsub.f32 %v185, %v501
    %v534 = vsub.f32 %v226, %v501
    %v535 = vsub.f32 %v147, %v506
    %v536 = vsub.f32 %v188, %v506
    %v537 = vsub.f32 %v229, %v506
    %v538 = vsub.f32 %v150, %v511
    %v539 = vsub.f32 %v191, %v511
    %v540 = vsub.f32 %v232, %v511
    %v541 = vsub.f32 %v153, %v516
    %v542 = vsub.f32 %v194, %v516
    %v543 = vsub.f32 %v235, %v516
    %v544 = vsub.f32 %v156, %v521
    %v545 = vsub.f32 %v197, %v521
    %v546 = vsub.f32 %v238, %v521
    %v547 = vmul.f32 %v523, 1.442695
    %v548 = vpow.pop %v547
    %v549 = vmul.f32 %v524, 1.442695
    %v550 = vpow.pop %v549
    %v551 = vmul.f32 %v525, 1.442695
    %v552 = vpow.pop %v551
    %v553 = vmul.f32 %v526, 1.442695
    %v554 = vpow.pop %v553
    %v555 = vmul.f32 %v527, 1.442695
    %v556 = vpow.pop %v555
    %v557 = vmul.f32 %v528, 1.442695
    %v558 = vpow.pop %v557
    %v559 = vmul.f32 %v529, 1.442695
    %v560 = vpow.pop %v559
    %v561 = vmul.f32 %v530, 1.442695
    %v562 = vpow.pop %v561
    %v563 = vmul.f32 %v531, 1.442695
    %v564 = vpow.pop %v563
    %v565 = vmul.f32 %v532, 1.442695
    %v566 = vpow.pop %v565
    %v567 = vmul.f32 %v533, 1.442695
    %v568 = vpow.pop %v567
    %v569 = vmul.f32 %v534, 1.442695
    %v570 = vpow.pop %v569
    %v571 = vmul.f32 %v535, 1.442695
    %v572 = vpow.pop %v571
    %v573 = vmul.f32 %v536, 1.442695
    %v574 = vpow.pop %v573
    %v575 = vmul.f32 %v537, 1.442695
    %v576 = vpow.pop %v575
    %v577 = vmul.f32 %v538, 1.442695
    %v578 = vpow.pop %v577
    %v579 = vmul.f32 %v539, 1.442695
    %v580 = vpow.pop %v579
    %v581 = vmul.f32 %v540, 1.442695
    %v582 = vpow.pop %v581
    %v583 = vmul.f32 %v541, 1.442695
    %v584 = vpow.pop %v583
    %v585 = vmul.f32 %v542, 1.442695
    %v586 = vpow.pop %v585
    %v587 = vmul.f32 %v543, 1.442695
    %v588 = vpow.pop %v587
    %v589 = vmul.f32 %v544, 1.442695
    %v590 = vpow.pop %v589
    %v591 = vmul.f32 %v545, 1.442695
    %v592 = vpow.pop %v591
    %v593 = vmul.f32 %v546, 1.442695
    %v594 = vpow.pop %v593
    %v595 = vadd.f32 %v548, %v550
    %v596 = vadd.f32 %v595, %v552
    %597 = vadd.xlane.f32.xlu0 %v596
    %v598 = vpop.xlane.xlu0 %597
    %v599 = vadd.f32 %v554, %v556
    %v600 = vadd.f32 %v599, %v558
    %601 = vadd.xlane.f32.xlu0 %v600
    %v602 = vpop.xlane.xlu0 %601
    %v603 = vadd.f32 %v560, %v562
    %v604 = vadd.f32 %v603, %v564
    %605 = vadd.xlane.f32.xlu0 %v604
    %v606 = vpop.xlane.xlu0 %605
    %v607 = vadd.f32 %v566, %v568
    %v608 = vadd.f32 %v607, %v570
    %609 = vadd.xlane.f32.xlu0 %v608
    %v610 = vpop.xlane.xlu0 %609
    %v611 = vadd.f32 %v572, %v574
    %v612 = vadd.f32 %v611, %v576
    %613 = vadd.xlane.f32.xlu0 %v612
    %v614 = vpop.xlane.xlu0 %613
    %v615 = vadd.f32 %v578, %v580
    %v616 = vadd.f32 %v615, %v582
    %617 = vadd.xlane.f32.xlu0 %v616
    %v618 = vpop.xlane.xlu0 %617
    %v619 = vadd.f32 %v584, %v586
    %v620 = vadd.f32 %v619, %v588
    %621 = vadd.xlane.f32.xlu0 %v620
    %v622 = vpop.xlane.xlu0 %621
    %v623 = vadd.f32 %v590, %v592
    %v624 = vadd.f32 %v623, %v594
    %625 = vadd.xlane.f32.xlu0 %v624
    %v626 = vpop.xlane.xlu0 %625
    %v627 = vadd.f32 %v475, %v598
    %v628 = vadd.f32 %v476, %v602
    %v629 = vadd.f32 %v477, %v606
    %v630 = vadd.f32 %v478, %v610
    %v631 = vadd.f32 %v479, %v614
    %v632 = vadd.f32 %v480, %v618
    %v633 = vadd.f32 %v481, %v622
    %v634 = vadd.f32 %v482, %v626
    %vm635 = vcmask 7168
    %636 = vst.msk [vmem:[%s258] sm:$0xff] %vm635, %v411
    %637 = vst.msk [vmem:[%s258 + $0x8] sm:$0xff] %vm635, %v412
    %638 = vst.msk [vmem:[%s258 + $0x10] sm:$0xff] %vm635, %v413
    %639 = vst.msk [vmem:[%s258 + $0x18] sm:$0xff] %vm635, %v414
    %640 = vst.msk [vmem:[%s258 + $0x20] sm:$0xff] %vm635, %v415
    %641 = vst.msk [vmem:[%s258 + $0x28] sm:$0xff] %vm635, %v416
    %642 = vst.msk [vmem:[%s258 + $0x30] sm:$0xff] %vm635, %v417
    %643 = vst.msk [vmem:[%s258 + $0x38] sm:$0xff] %vm635, %v418
    %652 = vrot.lane.b32.xlu0 %v627, 1
    %v653 = vpop.permute.xlu0 %652
    %654 = vrot.lane.b32.xlu0 %v628, 1
    %v655 = vpop.permute.xlu0 %654
    %656 = vrot.lane.b32.xlu0 %v629, 1
    %v657 = vpop.permute.xlu0 %656
    %658 = vrot.lane.b32.xlu0 %v630, 1
    %v659 = vpop.permute.xlu0 %658
    %660 = vrot.lane.b32.xlu0 %v631, 1
    %v661 = vpop.permute.xlu0 %660
    %662 = vrot.lane.b32.xlu0 %v632, 1
    %v663 = vpop.permute.xlu0 %662
    %664 = vrot.lane.b32.xlu0 %v633, 1
    %v665 = vpop.permute.xlu0 %664
    %666 = vrot.lane.b32.xlu0 %v634, 1
    %v667 = vpop.permute.xlu0 %666
    %vm676 = vcmask 15368
    %677 = vst.msk [vmem:[%s258] sm:$0xff] %vm676, %v653
    %678 = vst.msk [vmem:[%s258 + $0x8] sm:$0xff] %vm676, %v655
    %679 = vst.msk [vmem:[%s258 + $0x10] sm:$0xff] %vm676, %v657
    %680 = vst.msk [vmem:[%s258 + $0x18] sm:$0xff] %vm676, %v659
    %681 = vst.msk [vmem:[%s258 + $0x20] sm:$0xff] %vm676, %v661
    %682 = vst.msk [vmem:[%s258 + $0x28] sm:$0xff] %vm676, %v663
    %683 = vst.msk [vmem:[%s258 + $0x30] sm:$0xff] %vm676, %v665
    %684 = vst.msk [vmem:[%s258 + $0x38] sm:$0xff] %vm676, %v667
    %vm685 = vcmask 23568
    %686 = vst.msk [vmem:[%s258] sm:$0xff] %vm685, %v371
    %687 = vst.msk [vmem:[%s258 + $0x8] sm:$0xff] %vm685, %v372
    %688 = vst.msk [vmem:[%s258 + $0x10] sm:$0xff] %vm685, %v373
    %689 = vst.msk [vmem:[%s258 + $0x18] sm:$0xff] %vm685, %v374
    %690 = vst.msk [vmem:[%s258 + $0x20] sm:$0xff] %vm685, %v375
    %691 = vst.msk [vmem:[%s258 + $0x28] sm:$0xff] %vm685, %v376
    %692 = vst.msk [vmem:[%s258 + $0x30] sm:$0xff] %vm685, %v377
    %693 = vst.msk [vmem:[%s258 + $0x38] sm:$0xff] %vm685, %v378
    // Predicated region
    $region22: #{tpu_custom_call.1} parent=1 // pred_check
      %p694 = pneg %p30
    $region23: #{tpu_custom_call.1} parent=1 // pred_check_branch
      %696 = sbr.rel (%p694) target = $region25
    $region24: #{tpu_custom_call.1} parent=1 // pred_region
      %vm697 = vcmp.ne.s32.totalorder %v240, 4294967196
      %vm698 = vcmp.ne.s32.totalorder %v241, 4294967196
      %vm699 = vcmp.ne.s32.totalorder %v242, 4294967196
      %vm700 = vcmp.ne.s32.totalorder %v243, 4294967196
      %vm701 = vcmp.ne.s32.totalorder %v244, 4294967196
      %vm702 = vcmp.ne.s32.totalorder %v245, 4294967196
      %vm703 = vcmp.ne.s32.totalorder %v246, 4294967196
      %vm704 = vcmp.ne.s32.totalorder %v247, 4294967196
      %v705 = vsel %vm697, 1, 0
      %v706 = vsel %vm698, 1, 0
      %v707 = vsel %vm699, 1, 0
      %v708 = vsel %vm700, 1, 0
      %v709 = vsel %vm701, 1, 0
      %v710 = vsel %vm702, 1, 0
      %v711 = vsel %vm703, 1, 0
      %v712 = vsel %vm704, 1, 0
      %v713 = vcvt.s32.f32 %v705
      %v714 = vcvt.s32.f32 %v706
      %v715 = vcvt.s32.f32 %v707
      %v716 = vcvt.s32.f32 %v708
      %v717 = vcvt.s32.f32 %v709
      %v718 = vcvt.s32.f32 %v710
      %v719 = vcvt.s32.f32 %v711
      %v720 = vcvt.s32.f32 %v712
      %v721 = vlog2.pop %v627
      %v722 = vmul.f32 %v721, 0.6931472
      %v723 = vlog2.pop %v628
      %v724 = vmul.f32 %v723, 0.6931472
      %v725 = vlog2.pop %v629
      %v726 = vmul.f32 %v725, 0.6931472
      %v727 = vlog2.pop %v630
      %v728 = vmul.f32 %v727, 0.6931472
      %v729 = vlog2.pop %v631
      %v730 = vmul.f32 %v729, 0.6931472
      %v731 = vlog2.pop %v632
      %v732 = vmul.f32 %v731, 0.6931472
      %v733 = vlog2.pop %v633
      %v734 = vmul.f32 %v733, 0.6931472
      %v735 = vlog2.pop %v634
      %v736 = vmul.f32 %v735, 0.6931472
      %v737 = vadd.f32 %v411, %v722
      %v738 = vadd.f32 %v412, %v724
      %v739 = vadd.f32 %v413, %v726
      %v740 = vadd.f32 %v414, %v728
      %v741 = vadd.f32 %v415, %v730
      %v742 = vadd.f32 %v416, %v732
      %v743 = vadd.f32 %v417, %v734
      %v744 = vadd.f32 %v418, %v736
      %753 = vrot.lane.b32.xlu0 %v371, 126
      %v754 = vpop.permute.xlu0 %753
      %755 = vrot.lane.b32.xlu0 %v372, 126
      %v756 = vpop.permute.xlu0 %755
      %757 = vrot.lane.b32.xlu0 %v373, 126
      %v758 = vpop.permute.xlu0 %757
      %759 = vrot.lane.b32.xlu0 %v374, 126
      %v760 = vpop.permute.xlu0 %759
      %761 = vrot.lane.b32.xlu0 %v375, 126
      %v762 = vpop.permute.xlu0 %761
      %763 = vrot.lane.b32.xlu0 %v376, 126
      %v764 = vpop.permute.xlu0 %763
      %765 = vrot.lane.b32.xlu0 %v377, 126
      %v766 = vpop.permute.xlu0 %765
      %767 = vrot.lane.b32.xlu0 %v378, 126
      %v768 = vpop.permute.xlu0 %767
      %v777 = vsub.f32 %v737, %v754
      %v778 = vsub.f32 %v738, %v756
      %v779 = vsub.f32 %v739, %v758
      %v780 = vsub.f32 %v740, %v760
      %v781 = vsub.f32 %v741, %v762
      %v782 = vsub.f32 %v742, %v764
      %v783 = vsub.f32 %v743, %v766
      %v784 = vsub.f32 %v744, %v768
      %v785 = vmul.f32 %v777, %v713
      %v786 = vmul.f32 %v778, %v714
      %v787 = vmul.f32 %v779, %v715
      %v788 = vmul.f32 %v780, %v716
      %v789 = vmul.f32 %v781, %v717
      %v790 = vmul.f32 %v782, %v718
      %v791 = vmul.f32 %v783, %v719
      %v792 = vmul.f32 %v784, %v720
      %793 = vst.msk [vmem:[%s3] sm:$0xff] %vm635, %v785
      %794 = vst.msk [vmem:[%s3 + $0x8] sm:$0xff] %vm635, %v786
      %795 = vst.msk [vmem:[%s3 + $0x10] sm:$0xff] %vm635, %v787
      %796 = vst.msk [vmem:[%s3 + $0x18] sm:$0xff] %vm635, %v788
      %797 = vst.msk [vmem:[%s3 + $0x20] sm:$0xff] %vm635, %v789
      %798 = vst.msk [vmem:[%s3 + $0x28] sm:$0xff] %vm635, %v790
      %799 = vst.msk [vmem:[%s3 + $0x30] sm:$0xff] %vm635, %v791
      %800 = vst.msk [vmem:[%s3 + $0x38] sm:$0xff] %vm635, %v792
    $region25: #{tpu_custom_call.1} parent=1 // pred_fallthru
      _
    // Predicated region
    $region26: #{tpu_custom_call.1} parent=1 // pred_check
      _
    $region27: #{tpu_custom_call.1} parent=1 // pred_check_branch
      %802 = sbr.rel (0) target = $region29
    $region28: #{tpu_custom_call.1} parent=1 // pred_region
      _
    $region29: #{tpu_custom_call.1} parent=1 // pred_fallthru
      _
    // Predicated region
    $region30: #{tpu_custom_call.1} parent=1 // pred_check
      _
    $region31: #{tpu_custom_call.1} parent=1 // pred_check_branch
      %804 = sbr.rel (0) target = $region33
    $region32: #{tpu_custom_call.1} parent=1 // pred_region
      _
    $region33: #{tpu_custom_call.1} parent=1 // pred_fallthru
      _
    %805 = vsyncpa [#allocation4], 1

</llo_original>
